<compile_context>
chip_gen: v6e
topology: v6e:2x2x1
jax: 0.10.0
libtpu: 0.0.40
codegen_flags: <defaults>
</compile_context>

<pallas_src>
import numpy as np

import jax
import jax.numpy as jnp
from jax.experimental import pallas as pl
from jax.experimental.pallas import tpu as pltpu


# ----------------------------- Pallas kernel --------------------------------
def _make_mamba_layer_kernel(L, D, DI, N, K, T, unroll):
    """Build the kernel body with static shape parameters closed over."""

    def kernel(
        x_ref,        # (1, L, D)    f32
        w_in_ref,     # (D, 2*DI)    bf16   in_proj (x half | gate half)
        conv_w_ref,   # (K, DI)      f32
        conv_b_ref,   # (1, DI)      f32
        w_dtbc_ref,   # (DI, DI+2N)  bf16   [fused dt weight | B/C columns]
        b_dt_ref,     # (1, DI)      f32
        a_ndi_ref,    # (N, DI)      f32    = -exp(A_log).T
        d_skip_ref,   # (1, DI)      f32
        w_out_ref,    # (DI, D)      bf16
        gamma_ref,    # (1, D)       f32
        beta_ref,     # (1, D)       f32
        out_ref,      # (1, L, D)    f32
        # scratch
        dA_scr,       # (T, N, DI)   f32    exp(dt*A) for one chunk
        dBu_scr,      # (T, N, DI)   f32    (dt*u) (x) B for one chunk
        h_scr,        # (T, N, DI)   f32    per-step states for bulk C reduce
        y_scr,        # (L, DI)      f32    scan outputs
    ):
        x = x_ref[0]                                   # (L, D) f32
        x_bf = x.astype(jnp.bfloat16)

        # ---- in_proj: single (D, 2*DI) bf16 matmul, sliced at DI ----
        xz = jnp.dot(x_bf, w_in_ref[...], preferred_element_type=jnp.float32)
        x_in = xz[:, :DI]                              # (L, DI)
        z = xz[:, DI:]                                 # (L, DI)

        # ---- causal depthwise conv1d (K taps) + SiLU, value-level pad ----
        xpad = jnp.concatenate(
            [jnp.zeros((K - 1, DI), jnp.float32), x_in], axis=0)
        acc = conv_b_ref[...]                          # (1, DI)
        for k in range(K):                             # K is tiny & static
            acc = acc + conv_w_ref[k:k + 1, :] * xpad[k:k + L, :]
        u = acc * jax.nn.sigmoid(acc)                  # SiLU, (L, DI) f32
        u_bf = u.astype(jnp.bfloat16)

        # ---- fused dt + B/C projection: single (DI, DI+2N) matmul ----
        dtbc = jnp.dot(u_bf, w_dtbc_ref[...],
                       preferred_element_type=jnp.float32)
        dt = jax.nn.softplus(dtbc[:, :DI] + b_dt_ref[...])     # (L, DI) f32
        bc = dtbc[:, DI:DI + 2 * N]                             # (L, 2N) f32
        dtu = dt * u                                             # (L, DI)

        A = a_ndi_ref[...]                              # (N, DI): DI on lanes

        # ---- chunked selective scan: bulk EUP/VPU prework per chunk, the
        #      serial recurrence is a pure fma with h carried in registers ----
        h = jnp.zeros((N, DI), jnp.float32)
        for c0 in range(0, L, T):
            Tc = min(T, L - c0)
            dt_c = dt[c0:c0 + Tc]                       # (Tc, DI)
            dtu_c = dtu[c0:c0 + Tc]                     # (Tc, DI)
            b_c = bc[c0:c0 + Tc, 0:N]                   # (Tc, N)
            c_c = bc[c0:c0 + Tc, N:2 * N]               # (Tc, N)

            # bulk precompute (off the recurrence critical path)
            dA_scr[0:Tc] = jnp.exp(dt_c[:, None, :] * A[None, :, :])
            dBu_scr[0:Tc] = dtu_c[:, None, :] * b_c[:, :, None]

            def step(t, h):
                h = dA_scr[t] * h + dBu_scr[t]          # (N, DI) fma
                h_scr[t] = h
                return h

            h = jax.lax.fori_loop(0, Tc, step, h, unroll=unroll)

            # bulk C contraction + one aligned (Tc, DI) store per chunk
            y_c = jnp.sum(c_c[:, :, None] * h_scr[0:Tc], axis=1)
            y_scr[c0:c0 + Tc, :] = y_c

        # ---- D-skip (hoisted), gate, out_proj, residual, LayerNorm ----
        y = y_scr[...] + d_skip_ref[...] * u
        y = y * (z * jax.nn.sigmoid(z))
        mamba_out = jnp.dot(y.astype(jnp.bfloat16), w_out_ref[...],
                            preferred_element_type=jnp.float32)   # (L, D)

        res = x + mamba_out
        mean = jnp.mean(res, axis=-1, keepdims=True)
        var = jnp.mean((res - mean) ** 2, axis=-1, keepdims=True)
        normed = (res - mean) * jax.lax.rsqrt(var + 1e-5)
        out_ref[0] = (normed * gamma_ref[...] + beta_ref[...]).astype(
            out_ref.dtype)

    return kernel


# ------------------------------ wrapper --------------------------------------
def _prepare_inputs(params):
    """Batch-invariant prework hoisted out of the kernel (fused dt weight
    concatenated with B/C columns, A = -exp(A_log) transpose, bf16 casts)."""
    a_log = jnp.asarray(params["a_log"], jnp.float32)            # (DI, N)
    R = params["w_dt_t"].shape[0]

    w_in = jnp.asarray(params["w_in_t"], jnp.float32).astype(jnp.bfloat16)

    w_xproj = jnp.asarray(params["w_xproj_t"], jnp.float32)      # (DI, R+2N)
    w_dt = jnp.asarray(params["w_dt_t"], jnp.float32)            # (R, DI)
    w_dtf = jnp.dot(w_xproj[:, :R], w_dt,
                    precision=jax.lax.Precision.HIGHEST)         # (DI, DI)
    w_dtbc = jnp.concatenate([w_dtf, w_xproj[:, R:]],
                             axis=1).astype(jnp.bfloat16)        # (DI, DI+2N)

    a_ndi = jnp.transpose(-jnp.exp(a_log))                       # (N, DI)

    return (
        w_in,
        jnp.asarray(params["conv_w_t"], jnp.float32),
        jnp.asarray(params["conv_b"], jnp.float32),
        w_dtbc,
        jnp.asarray(params["b_dt"], jnp.float32),
        a_ndi,
        jnp.asarray(params["d_skip"], jnp.float32),
        jnp.asarray(params["w_out_t"], jnp.bfloat16),
        jnp.asarray(params["gamma"], jnp.float32),
        jnp.asarray(params["beta"], jnp.float32),
    )


def mamba_layer(x, params):
    x = jnp.asarray(x, jnp.float32)
    B, L, D = x.shape
    inputs = _prepare_inputs(params)
    a_ndi = inputs[5]
    N, DI = a_ndi.shape
    K = inputs[1].shape[0]

    # scan chunk length (bounds the (T, N, DI) precompute scratches)
    T = min(L, 32)

    # cap the fori_loop unroll by the vreg footprint of the carried state
    di_pad = -(-DI // 128) * 128
    n_pad = -(-N // 8) * 8
    carry_vregs = max(1, (n_pad * di_pad) // 1024)
    unroll = int(max(1, min(8, (48 - carry_vregs) // (2 * carry_vregs))))

    kernel = _make_mamba_layer_kernel(L, D, DI, N, K, T, unroll)

    # per-generation VMEM budget (v5e/v6e: 128 MiB physical, v7x: 64 MiB)
    try:
        vmem_cap = int(pltpu.get_tpu_info().vmem_capacity_bytes)
    except Exception:
        vmem_cap = 64 * 1024 * 1024
    vmem_limit = int(min(100 * 1024 * 1024, (vmem_cap * 3) // 4))

    def w_spec(a):
        # grid-invariant weight blocks (constant index_map across the batch)
        return pl.BlockSpec(a.shape, lambda b: (0,) * a.ndim)

    grid_spec = pltpu.PrefetchScalarGridSpec(
        num_scalar_prefetch=0,
        grid=(B,),
        in_specs=[pl.BlockSpec((1, L, D), lambda b: (b, 0, 0))]
                 + [w_spec(a) for a in inputs],
        out_specs=pl.BlockSpec((1, L, D), lambda b: (b, 0, 0)),
        scratch_shapes=[
            pltpu.VMEM((T, N, DI), jnp.float32),   # exp(dt*A) chunk
            pltpu.VMEM((T, N, DI), jnp.float32),   # (dt*u) (x) B chunk
            pltpu.VMEM((T, N, DI), jnp.float32),   # per-step states
            pltpu.VMEM((L, DI), jnp.float32),      # scan outputs
        ],
    )
    return pl.pallas_call(
        kernel,
        out_shape=jax.ShapeDtypeStruct((B, L, D), jnp.float32),
        grid_spec=grid_spec,
        compiler_params=pltpu.CompilerParams(
            dimension_semantics=("parallel",),     # batch is independent
            vmem_limit_bytes=vmem_limit,
        ),
    )(x, *inputs)


# ----------------------- numpy reference (spec math) -------------------------
def _round_bf16(a):
    """Emulate the kernel's intentional bf16 casts of matmul operands."""
    return np.asarray(
        jnp.asarray(np.asarray(a, np.float32)).astype(jnp.bfloat16)
        .astype(jnp.float32))


def _ref_forward(x, params):
    q = _round_bf16

    def silu(v):
        return v / (1.0 + np.exp(-v))

    def softplus(v):
        return np.log1p(np.exp(-np.abs(v))) + np.maximum(v, 0.0)

    p = {k: np.asarray(v, np.float32) for k, v in params.items()}
    B, L, D = x.shape
    K = p["conv_w_t"].shape[0]
    R = p["w_dt_t"].shape[0]
    DI, N = p["a_log"].shape

    w_in = q(p["w_in_t"])
    w_dtf = q(p["w_xproj_t"][:, :R] @ p["w_dt_t"])   # fused dt weight
    w_bc = q(p["w_xproj_t"][:, R:])
    w_out = q(p["w_out_t"])
    A = -np.exp(p["a_log"])                          # (DI, N)

    out = np.zeros_like(x)
    for b in range(B):
        xb = x[b]
        xz = q(xb) @ w_in
        x_in, z = xz[:, :DI], xz[:, DI:]
        xpad = np.concatenate([np.zeros((K - 1, DI), np.float32), x_in], 0)
        conv = p["conv_b"].copy()
        for k in range(K):
            conv = conv + p["conv_w_t"][k:k + 1, :] * xpad[k:k + L, :]
        u = silu(conv)
        dt = softplus(q(u) @ w_dtf + p["b_dt"])
        bc = q(u) @ w_bc
        Bm, Cm = bc[:, :N], bc[:, N:]
        h = np.zeros((DI, N), np.float32)
        ys = []
        for t in range(L):
            h = (np.exp(dt[t][:, None] * A) * h
                 + (dt[t] * u[t])[:, None] * Bm[t][None, :])
            ys.append((h * Cm[t][None, :]).sum(-1))
        y = np.stack(ys) + p["d_skip"][0] * u
        y = y * silu(z)
        m_out = q(y) @ w_out
        res = xb + m_out
        mean = res.mean(-1, keepdims=True)
        var = ((res - mean) ** 2).mean(-1, keepdims=True)
        out[b] = (res - mean) / np.sqrt(var + 1e-5) * p["gamma"] + p["beta"]
    return out


# --------------------------------- main ---------------------------------------
if __name__ == "__main__":
    # Small Mamba-style sizes (d_model=32 -> d_inner=64, d_state=8, d_conv=4)
    B, L, D = 2, 8, 32
    expand, N, K = 2, 8, 4
    DI = expand * D                 # 64
    R = max(1, -(-D // 16))         # ceil(d_model / 16) = 2

    key = jax.random.PRNGKey(0)
    ks = jax.random.split(key, 8)

    params = {
        "w_in_t":    0.05 * jax.random.normal(ks[0], (D, 2 * DI), jnp.float32),
        "conv_w_t":  0.20 * jax.random.normal(ks[1], (K, DI), jnp.float32),
        "conv_b":    jnp.zeros((1, DI), jnp.float32),
        "w_xproj_t": 0.05 * jax.random.normal(ks[2], (DI, R + 2 * N), jnp.float32),
        "w_dt_t":    0.20 * jax.random.normal(ks[3], (R, DI), jnp.float32),
        "b_dt":      jnp.full((1, DI), 0.5, jnp.float32),
        "a_log":     jnp.log(jnp.tile(jnp.arange(1, N + 1, dtype=jnp.float32),
                                      (DI, 1))),
        "d_skip":    jnp.ones((1, DI), jnp.float32),
        "w_out_t":   0.05 * jax.random.normal(ks[4], (DI, D), jnp.float32),
        "gamma":     jnp.ones((1, D), jnp.float32),
        "beta":      jnp.zeros((1, D), jnp.float32),
    }

    x = jax.random.normal(ks[5], (B, L, D), jnp.float32)

    out = jax.block_until_ready(mamba_layer(x, params))

    ref = _ref_forward(np.asarray(x, np.float32), params)
    err = np.abs(np.asarray(out) - ref).max()
    if not np.allclose(np.asarray(out), ref, rtol=2e-3, atol=2e-3):
        raise AssertionError(f"mismatch: max abs err {err}")

    print("KERNEL_OK")
</pallas_src>

<mosaic_0001>
module attributes {stable_mosaic.version = 11 : i64} {
  func.func @kernel(%arg0: i32, %arg1: memref<1x8x32xf32, #tpu.memory_space<vmem>>, %arg2: memref<32x128xbf16, #tpu.memory_space<vmem>>, %arg3: memref<4x64xf32, #tpu.memory_space<vmem>>, %arg4: memref<1x64xf32, #tpu.memory_space<vmem>>, %arg5: memref<64x80xbf16, #tpu.memory_space<vmem>>, %arg6: memref<1x64xf32, #tpu.memory_space<vmem>>, %arg7: memref<8x64xf32, #tpu.memory_space<vmem>>, %arg8: memref<1x64xf32, #tpu.memory_space<vmem>>, %arg9: memref<64x32xbf16, #tpu.memory_space<vmem>>, %arg10: memref<1x32xf32, #tpu.memory_space<vmem>>, %arg11: memref<1x32xf32, #tpu.memory_space<vmem>>, %arg12: memref<1x8x32xf32, #tpu.memory_space<vmem>>, %arg13: memref<8x8x64xf32, #tpu.memory_space<vmem>>, %arg14: memref<8x8x64xf32, #tpu.memory_space<vmem>>, %arg15: memref<8x8x64xf32, #tpu.memory_space<vmem>>, %arg16: memref<8x64xf32, #tpu.memory_space<vmem>>) attributes {dimension_semantics = [#tpu.dimension_semantics<parallel>], iteration_bounds = array<i64: 2>, scalar_prefetch = 0 : i64, scratch_operands = 4 : i64, tpu.core_type = #tpu.core_type<tc>, window_params = [{transform_indices = @transform_0, window_bounds = array<i64: 1, 8, 32>}, {pipeline_mode = #tpu.pipeline_mode<synchronous>, transform_indices = @transform_1, window_bounds = array<i64: 32, 128>}, {pipeline_mode = #tpu.pipeline_mode<synchronous>, transform_indices = @transform_2, window_bounds = array<i64: 4, 64>}, {pipeline_mode = #tpu.pipeline_mode<synchronous>, transform_indices = @transform_3, window_bounds = array<i64: 1, 64>}, {pipeline_mode = #tpu.pipeline_mode<synchronous>, transform_indices = @transform_4, window_bounds = array<i64: 64, 80>}, {pipeline_mode = #tpu.pipeline_mode<synchronous>, transform_indices = @transform_5, window_bounds = array<i64: 1, 64>}, {pipeline_mode = #tpu.pipeline_mode<synchronous>, transform_indices = @transform_6, window_bounds = array<i64: 8, 64>}, {pipeline_mode = #tpu.pipeline_mode<synchronous>, transform_indices = @transform_7, window_bounds = array<i64: 1, 64>}, {pipeline_mode = #tpu.pipeline_mode<synchronous>, transform_indices = @transform_8, window_bounds = array<i64: 64, 32>}, {pipeline_mode = #tpu.pipeline_mode<synchronous>, transform_indices = @transform_9, window_bounds = array<i64: 1, 32>}, {pipeline_mode = #tpu.pipeline_mode<synchronous>, transform_indices = @transform_10, window_bounds = array<i64: 1, 32>}, {transform_indices = @transform_11, window_bounds = array<i64: 1, 8, 32>}]} {
    %c0 = arith.constant 0 : index
    %c0_0 = arith.constant 0 : index
    %c0_1 = arith.constant 0 : index
    %0 = vector.load %arg1[%c0, %c0_0, %c0_1] : memref<1x8x32xf32, #tpu.memory_space<vmem>>, vector<1x8x32xf32>
    %1 = vector.shape_cast %0 : vector<1x8x32xf32> to vector<8x32xf32>
    %2 = arith.truncf %1 : vector<8x32xf32> to vector<8x32xbf16>
    %c0_2 = arith.constant 0 : index
    %c0_3 = arith.constant 0 : index
    %3 = vector.load %arg2[%c0_2, %c0_3] : memref<32x128xbf16, #tpu.memory_space<vmem>>, vector<32x128xbf16>
    %cst = arith.constant dense<0.000000e+00> : vector<8x128xf32>
    %4 = tpu.matmul %2, %3, %cst {dimension_numbers = #tpu.dot_dimension_numbers<[1], [0], [0], [1], [0, 0, 1, 1], [], []>} : vector<8x32xbf16>, vector<32x128xbf16>, vector<8x128xf32> -> vector<8x128xf32>
    %5 = vector.extract_strided_slice %4 {offsets = [0, 0], sizes = [8, 64], strides = [1, 1]} : vector<8x128xf32> to vector<8x64xf32>
    %6 = vector.extract_strided_slice %4 {offsets = [0, 64], sizes = [8, 64], strides = [1, 1]} : vector<8x128xf32> to vector<8x64xf32>
    %cst_4 = arith.constant 0.000000e+00 : f32
    %7 = vector.broadcast %cst_4 : f32 to vector<3x64xf32>
    %8 = tpu.concatenate %7, %5 in 0 : vector<3x64xf32>, vector<8x64xf32> -> vector<11x64xf32>
    %c0_5 = arith.constant 0 : index
    %c0_6 = arith.constant 0 : index
    %9 = vector.load %arg4[%c0_5, %c0_6] : memref<1x64xf32, #tpu.memory_space<vmem>>, vector<1x64xf32>
    %c0_7 = arith.constant 0 : index
    %c0_8 = arith.constant 0 : index
    %10 = vector.load %arg3[%c0_7, %c0_8] : memref<4x64xf32, #tpu.memory_space<vmem>>, vector<1x64xf32>
    %11 = vector.extract_strided_slice %8 {offsets = [0, 0], sizes = [8, 64], strides = [1, 1]} : vector<11x64xf32> to vector<8x64xf32>
    %12 = vector.broadcast %10 : vector<1x64xf32> to vector<8x64xf32>
    %13 = arith.mulf %12, %11 : vector<8x64xf32>
    %14 = vector.broadcast %9 : vector<1x64xf32> to vector<8x64xf32>
    %15 = arith.addf %14, %13 : vector<8x64xf32>
    %c1 = arith.constant 1 : index
    %c0_9 = arith.constant 0 : index
    %16 = vector.load %arg3[%c1, %c0_9] : memref<4x64xf32, #tpu.memory_space<vmem>>, vector<1x64xf32>
    %17 = vector.extract_strided_slice %8 {offsets = [1, 0], sizes = [8, 64], strides = [1, 1]} : vector<11x64xf32> to vector<8x64xf32>
    %18 = vector.broadcast %16 : vector<1x64xf32> to vector<8x64xf32>
    %19 = arith.mulf %18, %17 : vector<8x64xf32>
    %20 = arith.addf %15, %19 : vector<8x64xf32>
    %c2 = arith.constant 2 : index
    %c0_10 = arith.constant 0 : index
    %21 = vector.load %arg3[%c2, %c0_10] : memref<4x64xf32, #tpu.memory_space<vmem>>, vector<1x64xf32>
    %22 = vector.extract_strided_slice %8 {offsets = [2, 0], sizes = [8, 64], strides = [1, 1]} : vector<11x64xf32> to vector<8x64xf32>
    %23 = vector.broadcast %21 : vector<1x64xf32> to vector<8x64xf32>
    %24 = arith.mulf %23, %22 : vector<8x64xf32>
    %25 = arith.addf %20, %24 : vector<8x64xf32>
    %c3 = arith.constant 3 : index
    %c0_11 = arith.constant 0 : index
    %26 = vector.load %arg3[%c3, %c0_11] : memref<4x64xf32, #tpu.memory_space<vmem>>, vector<1x64xf32>
    %27 = vector.extract_strided_slice %8 {offsets = [3, 0], sizes = [8, 64], strides = [1, 1]} : vector<11x64xf32> to vector<8x64xf32>
    %28 = vector.broadcast %26 : vector<1x64xf32> to vector<8x64xf32>
    %29 = arith.mulf %28, %27 : vector<8x64xf32>
    %30 = arith.addf %25, %29 : vector<8x64xf32>
    %31 = arith.negf %30 : vector<8x64xf32>
    %32 = math.exp %31 : vector<8x64xf32>
    %cst_12 = arith.constant 1.000000e+00 : f32
    %33 = vector.broadcast %cst_12 : f32 to vector<8x64xf32>
    %34 = arith.addf %33, %32 : vector<8x64xf32>
    %35 = arith.divf %33, %34 : vector<8x64xf32>
    %36 = arith.mulf %30, %35 : vector<8x64xf32>
    %37 = arith.truncf %36 : vector<8x64xf32> to vector<8x64xbf16>
    %c0_13 = arith.constant 0 : index
    %c0_14 = arith.constant 0 : index
    %38 = vector.load %arg5[%c0_13, %c0_14] : memref<64x80xbf16, #tpu.memory_space<vmem>>, vector<64x80xbf16>
    %cst_15 = arith.constant dense<0.000000e+00> : vector<8x80xf32>
    %39 = tpu.matmul %37, %38, %cst_15 {dimension_numbers = #tpu.dot_dimension_numbers<[1], [0], [0], [1], [0, 0, 1, 1], [], []>} : vector<8x64xbf16>, vector<64x80xbf16>, vector<8x80xf32> -> vector<8x80xf32>
    %40 = vector.extract_strided_slice %39 {offsets = [0, 0], sizes = [8, 64], strides = [1, 1]} : vector<8x80xf32> to vector<8x64xf32>
    %c0_16 = arith.constant 0 : index
    %c0_17 = arith.constant 0 : index
    %41 = vector.load %arg6[%c0_16, %c0_17] : memref<1x64xf32, #tpu.memory_space<vmem>>, vector<1x64xf32>
    %42 = vector.broadcast %41 : vector<1x64xf32> to vector<8x64xf32>
    %43 = arith.addf %40, %42 : vector<8x64xf32>
    %cst_18 = arith.constant 0.000000e+00 : f32
    %44 = vector.broadcast %cst_18 : f32 to vector<8x64xf32>
    %45 = arith.maximumf %43, %44 : vector<8x64xf32>
    %46 = vector.broadcast %cst_18 : f32 to vector<8x64xf32>
    %47 = arith.subf %43, %46 : vector<8x64xf32>
    %48 = arith.cmpf one, %47, %47 : vector<8x64xf32>
    %49 = vector.broadcast %cst_18 : f32 to vector<8x64xf32>
    %50 = arith.addf %43, %49 : vector<8x64xf32>
    %51 = math.absf %47 : vector<8x64xf32>
    %cst_19 = arith.constant 0.000000e+00 : f32
    %52 = vector.broadcast %cst_19 : f32 to vector<8x64xf32>
    %53 = arith.subf %52, %51 : vector<8x64xf32>
    %54 = math.exp %53 : vector<8x64xf32>
    %55 = math.log1p %54 : vector<8x64xf32>
    %56 = arith.addf %45, %55 : vector<8x64xf32>
    %57 = arith.select %48, %50, %56 : vector<8x64xi1>, vector<8x64xf32>
    %58 = vector.extract_strided_slice %39 {offsets = [0, 64], sizes = [8, 16], strides = [1, 1]} : vector<8x80xf32> to vector<8x16xf32>
    %59 = arith.mulf %57, %36 : vector<8x64xf32>
    %c0_20 = arith.constant 0 : index
    %c0_21 = arith.constant 0 : index
    %60 = vector.load %arg7[%c0_20, %c0_21] : memref<8x64xf32, #tpu.memory_space<vmem>>, vector<8x64xf32>
    %cst_22 = arith.constant 0.000000e+00 : f32
    %61 = vector.broadcast %cst_22 : f32 to vector<8x64xf32>
    %62 = vector.extract_strided_slice %58 {offsets = [0, 0], sizes = [8, 8], strides = [1, 1]} : vector<8x16xf32> to vector<8x8xf32>
    %63 = vector.extract_strided_slice %58 {offsets = [0, 8], sizes = [8, 8], strides = [1, 1]} : vector<8x16xf32> to vector<8x8xf32>
    %64 = vector.shape_cast %57 : vector<8x64xf32> to vector<8x1x64xf32>
    %65 = vector.shape_cast %60 : vector<8x64xf32> to vector<1x8x64xf32>
    %66 = vector.broadcast %64 : vector<8x1x64xf32> to vector<8x8x64xf32>
    %67 = vector.broadcast %65 : vector<1x8x64xf32> to vector<8x8x64xf32>
    %68 = arith.mulf %66, %67 : vector<8x8x64xf32>
    %69 = math.exp %68 : vector<8x8x64xf32>
    %c0_23 = arith.constant 0 : index
    %c0_24 = arith.constant 0 : index
    %c0_25 = arith.constant 0 : index
    %70 = vector.load %arg13[%c0_23, %c0_24, %c0_25] : memref<8x8x64xf32, #tpu.memory_space<vmem>>, vector<8x8x64xf32>
    tpu.vector_store %arg13[%c0_23, %c0_24, %c0_25], %69 {strides = array<i32>} : memref<8x8x64xf32, #tpu.memory_space<vmem>>, vector<8x8x64xf32>,
    %71 = vector.shape_cast %59 : vector<8x64xf32> to vector<8x1x64xf32>
    %72 = vector.shape_cast %62 : vector<8x8xf32> to vector<8x8x1xf32>
    %73 = vector.broadcast %71 : vector<8x1x64xf32> to vector<8x8x64xf32>
    %74 = vector.broadcast %72 : vector<8x8x1xf32> to vector<8x8x64xf32>
    %75 = arith.mulf %73, %74 : vector<8x8x64xf32>
    %c0_26 = arith.constant 0 : index
    %c0_27 = arith.constant 0 : index
    %c0_28 = arith.constant 0 : index
    %76 = vector.load %arg14[%c0_26, %c0_27, %c0_28] : memref<8x8x64xf32, #tpu.memory_space<vmem>>, vector<8x8x64xf32>
    tpu.vector_store %arg14[%c0_26, %c0_27, %c0_28], %75 {strides = array<i32>} : memref<8x8x64xf32, #tpu.memory_space<vmem>>, vector<8x8x64xf32>,
    %c0_i32 = arith.constant 0 : i32
    %77 = arith.index_cast %c0_i32 : i32 to index
    %c0_29 = arith.constant 0 : index
    %c0_30 = arith.constant 0 : index
    %78 = vector.load %arg13[%77, %c0_29, %c0_30] : memref<8x8x64xf32, #tpu.memory_space<vmem>>, vector<1x8x64xf32>
    %79 = vector.shape_cast %78 : vector<1x8x64xf32> to vector<8x64xf32>
    %80 = arith.mulf %79, %61 : vector<8x64xf32>
    %81 = arith.index_cast %c0_i32 : i32 to index
    %c0_31 = arith.constant 0 : index
    %c0_32 = arith.constant 0 : index
    %82 = vector.load %arg14[%81, %c0_31, %c0_32] : memref<8x8x64xf32, #tpu.memory_space<vmem>>, vector<1x8x64xf32>
    %83 = vector.shape_cast %82 : vector<1x8x64xf32> to vector<8x64xf32>
    %84 = arith.addf %80, %83 : vector<8x64xf32>
    %85 = arith.index_cast %c0_i32 : i32 to index
    %c0_33 = arith.constant 0 : index
    %c0_34 = arith.constant 0 : index
    %86 = vector.load %arg15[%85, %c0_33, %c0_34] : memref<8x8x64xf32, #tpu.memory_space<vmem>>, vector<1x8x64xf32>
    %87 = vector.shape_cast %86 : vector<1x8x64xf32> to vector<8x64xf32>
    %88 = vector.shape_cast %84 : vector<8x64xf32> to vector<1x8x64xf32>
    tpu.vector_store %arg15[%85, %c0_33, %c0_34], %88 {strides = array<i32>} : memref<8x8x64xf32, #tpu.memory_space<vmem>>, vector<1x8x64xf32>,
    %c1_i32 = arith.constant 1 : i32
    %89 = arith.index_cast %c1_i32 : i32 to index
    %c0_35 = arith.constant 0 : index
    %c0_36 = arith.constant 0 : index
    %90 = vector.load %arg13[%89, %c0_35, %c0_36] : memref<8x8x64xf32, #tpu.memory_space<vmem>>, vector<1x8x64xf32>
    %91 = vector.shape_cast %90 : vector<1x8x64xf32> to vector<8x64xf32>
    %92 = arith.mulf %91, %84 : vector<8x64xf32>
    %93 = arith.index_cast %c1_i32 : i32 to index
    %c0_37 = arith.constant 0 : index
    %c0_38 = arith.constant 0 : index
    %94 = vector.load %arg14[%93, %c0_37, %c0_38] : memref<8x8x64xf32, #tpu.memory_space<vmem>>, vector<1x8x64xf32>
    %95 = vector.shape_cast %94 : vector<1x8x64xf32> to vector<8x64xf32>
    %96 = arith.addf %92, %95 : vector<8x64xf32>
    %97 = arith.index_cast %c1_i32 : i32 to index
    %c0_39 = arith.constant 0 : index
    %c0_40 = arith.constant 0 : index
    %98 = vector.load %arg15[%97, %c0_39, %c0_40] : memref<8x8x64xf32, #tpu.memory_space<vmem>>, vector<1x8x64xf32>
    %99 = vector.shape_cast %98 : vector<1x8x64xf32> to vector<8x64xf32>
    %100 = vector.shape_cast %96 : vector<8x64xf32> to vector<1x8x64xf32>
    tpu.vector_store %arg15[%97, %c0_39, %c0_40], %100 {strides = array<i32>} : memref<8x8x64xf32, #tpu.memory_space<vmem>>, vector<1x8x64xf32>,
    %c2_i32 = arith.constant 2 : i32
    %101 = arith.index_cast %c2_i32 : i32 to index
    %c0_41 = arith.constant 0 : index
    %c0_42 = arith.constant 0 : index
    %102 = vector.load %arg13[%101, %c0_41, %c0_42] : memref<8x8x64xf32, #tpu.memory_space<vmem>>, vector<1x8x64xf32>
    %103 = vector.shape_cast %102 : vector<1x8x64xf32> to vector<8x64xf32>
    %104 = arith.mulf %103, %96 : vector<8x64xf32>
    %105 = arith.index_cast %c2_i32 : i32 to index
    %c0_43 = arith.constant 0 : index
    %c0_44 = arith.constant 0 : index
    %106 = vector.load %arg14[%105, %c0_43, %c0_44] : memref<8x8x64xf32, #tpu.memory_space<vmem>>, vector<1x8x64xf32>
    %107 = vector.shape_cast %106 : vector<1x8x64xf32> to vector<8x64xf32>
    %108 = arith.addf %104, %107 : vector<8x64xf32>
    %109 = arith.index_cast %c2_i32 : i32 to index
    %c0_45 = arith.constant 0 : index
    %c0_46 = arith.constant 0 : index
    %110 = vector.load %arg15[%109, %c0_45, %c0_46] : memref<8x8x64xf32, #tpu.memory_space<vmem>>, vector<1x8x64xf32>
    %111 = vector.shape_cast %110 : vector<1x8x64xf32> to vector<8x64xf32>
    %112 = vector.shape_cast %108 : vector<8x64xf32> to vector<1x8x64xf32>
    tpu.vector_store %arg15[%109, %c0_45, %c0_46], %112 {strides = array<i32>} : memref<8x8x64xf32, #tpu.memory_space<vmem>>, vector<1x8x64xf32>,
    %c3_i32 = arith.constant 3 : i32
    %113 = arith.index_cast %c3_i32 : i32 to index
    %c0_47 = arith.constant 0 : index
    %c0_48 = arith.constant 0 : index
    %114 = vector.load %arg13[%113, %c0_47, %c0_48] : memref<8x8x64xf32, #tpu.memory_space<vmem>>, vector<1x8x64xf32>
    %115 = vector.shape_cast %114 : vector<1x8x64xf32> to vector<8x64xf32>
    %116 = arith.mulf %115, %108 : vector<8x64xf32>
    %117 = arith.index_cast %c3_i32 : i32 to index
    %c0_49 = arith.constant 0 : index
    %c0_50 = arith.constant 0 : index
    %118 = vector.load %arg14[%117, %c0_49, %c0_50] : memref<8x8x64xf32, #tpu.memory_space<vmem>>, vector<1x8x64xf32>
    %119 = vector.shape_cast %118 : vector<1x8x64xf32> to vector<8x64xf32>
    %120 = arith.addf %116, %119 : vector<8x64xf32>
    %121 = arith.index_cast %c3_i32 : i32 to index
    %c0_51 = arith.constant 0 : index
    %c0_52 = arith.constant 0 : index
    %122 = vector.load %arg15[%121, %c0_51, %c0_52] : memref<8x8x64xf32, #tpu.memory_space<vmem>>, vector<1x8x64xf32>
    %123 = vector.shape_cast %122 : vector<1x8x64xf32> to vector<8x64xf32>
    %124 = vector.shape_cast %120 : vector<8x64xf32> to vector<1x8x64xf32>
    tpu.vector_store %arg15[%121, %c0_51, %c0_52], %124 {strides = array<i32>} : memref<8x8x64xf32, #tpu.memory_space<vmem>>, vector<1x8x64xf32>,
    %c4_i32 = arith.constant 4 : i32
    %125 = arith.index_cast %c4_i32 : i32 to index
    %c0_53 = arith.constant 0 : index
    %c0_54 = arith.constant 0 : index
    %126 = vector.load %arg13[%125, %c0_53, %c0_54] : memref<8x8x64xf32, #tpu.memory_space<vmem>>, vector<1x8x64xf32>
    %127 = vector.shape_cast %126 : vector<1x8x64xf32> to vector<8x64xf32>
    %128 = arith.mulf %127, %120 : vector<8x64xf32>
    %129 = arith.index_cast %c4_i32 : i32 to index
    %c0_55 = arith.constant 0 : index
    %c0_56 = arith.constant 0 : index
    %130 = vector.load %arg14[%129, %c0_55, %c0_56] : memref<8x8x64xf32, #tpu.memory_space<vmem>>, vector<1x8x64xf32>
    %131 = vector.shape_cast %130 : vector<1x8x64xf32> to vector<8x64xf32>
    %132 = arith.addf %128, %131 : vector<8x64xf32>
    %133 = arith.index_cast %c4_i32 : i32 to index
    %c0_57 = arith.constant 0 : index
    %c0_58 = arith.constant 0 : index
    %134 = vector.load %arg15[%133, %c0_57, %c0_58] : memref<8x8x64xf32, #tpu.memory_space<vmem>>, vector<1x8x64xf32>
    %135 = vector.shape_cast %134 : vector<1x8x64xf32> to vector<8x64xf32>
    %136 = vector.shape_cast %132 : vector<8x64xf32> to vector<1x8x64xf32>
    tpu.vector_store %arg15[%133, %c0_57, %c0_58], %136 {strides = array<i32>} : memref<8x8x64xf32, #tpu.memory_space<vmem>>, vector<1x8x64xf32>,
    %c5_i32 = arith.constant 5 : i32
    %137 = arith.index_cast %c5_i32 : i32 to index
    %c0_59 = arith.constant 0 : index
    %c0_60 = arith.constant 0 : index
    %138 = vector.load %arg13[%137, %c0_59, %c0_60] : memref<8x8x64xf32, #tpu.memory_space<vmem>>, vector<1x8x64xf32>
    %139 = vector.shape_cast %138 : vector<1x8x64xf32> to vector<8x64xf32>
    %140 = arith.mulf %139, %132 : vector<8x64xf32>
    %141 = arith.index_cast %c5_i32 : i32 to index
    %c0_61 = arith.constant 0 : index
    %c0_62 = arith.constant 0 : index
    %142 = vector.load %arg14[%141, %c0_61, %c0_62] : memref<8x8x64xf32, #tpu.memory_space<vmem>>, vector<1x8x64xf32>
    %143 = vector.shape_cast %142 : vector<1x8x64xf32> to vector<8x64xf32>
    %144 = arith.addf %140, %143 : vector<8x64xf32>
    %145 = arith.index_cast %c5_i32 : i32 to index
    %c0_63 = arith.constant 0 : index
    %c0_64 = arith.constant 0 : index
    %146 = vector.load %arg15[%145, %c0_63, %c0_64] : memref<8x8x64xf32, #tpu.memory_space<vmem>>, vector<1x8x64xf32>
    %147 = vector.shape_cast %146 : vector<1x8x64xf32> to vector<8x64xf32>
    %148 = vector.shape_cast %144 : vector<8x64xf32> to vector<1x8x64xf32>
    tpu.vector_store %arg15[%145, %c0_63, %c0_64], %148 {strides = array<i32>} : memref<8x8x64xf32, #tpu.memory_space<vmem>>, vector<1x8x64xf32>,
    %c6_i32 = arith.constant 6 : i32
    %149 = arith.index_cast %c6_i32 : i32 to index
    %c0_65 = arith.constant 0 : index
    %c0_66 = arith.constant 0 : index
    %150 = vector.load %arg13[%149, %c0_65, %c0_66] : memref<8x8x64xf32, #tpu.memory_space<vmem>>, vector<1x8x64xf32>
    %151 = vector.shape_cast %150 : vector<1x8x64xf32> to vector<8x64xf32>
    %152 = arith.mulf %151, %144 : vector<8x64xf32>
    %153 = arith.index_cast %c6_i32 : i32 to index
    %c0_67 = arith.constant 0 : index
    %c0_68 = arith.constant 0 : index
    %154 = vector.load %arg14[%153, %c0_67, %c0_68] : memref<8x8x64xf32, #tpu.memory_space<vmem>>, vector<1x8x64xf32>
    %155 = vector.shape_cast %154 : vector<1x8x64xf32> to vector<8x64xf32>
    %156 = arith.addf %152, %155 : vector<8x64xf32>
    %157 = arith.index_cast %c6_i32 : i32 to index
    %c0_69 = arith.constant 0 : index
    %c0_70 = arith.constant 0 : index
    %158 = vector.load %arg15[%157, %c0_69, %c0_70] : memref<8x8x64xf32, #tpu.memory_space<vmem>>, vector<1x8x64xf32>
    %159 = vector.shape_cast %158 : vector<1x8x64xf32> to vector<8x64xf32>
    %160 = vector.shape_cast %156 : vector<8x64xf32> to vector<1x8x64xf32>
    tpu.vector_store %arg15[%157, %c0_69, %c0_70], %160 {strides = array<i32>} : memref<8x8x64xf32, #tpu.memory_space<vmem>>, vector<1x8x64xf32>,
    %c7_i32 = arith.constant 7 : i32
    %161 = arith.index_cast %c7_i32 : i32 to index
    %c0_71 = arith.constant 0 : index
    %c0_72 = arith.constant 0 : index
    %162 = vector.load %arg13[%161, %c0_71, %c0_72] : memref<8x8x64xf32, #tpu.memory_space<vmem>>, vector<1x8x64xf32>
    %163 = vector.shape_cast %162 : vector<1x8x64xf32> to vector<8x64xf32>
    %164 = arith.mulf %163, %156 : vector<8x64xf32>
    %165 = arith.index_cast %c7_i32 : i32 to index
    %c0_73 = arith.constant 0 : index
    %c0_74 = arith.constant 0 : index
    %166 = vector.load %arg14[%165, %c0_73, %c0_74] : memref<8x8x64xf32, #tpu.memory_space<vmem>>, vector<1x8x64xf32>
    %167 = vector.shape_cast %166 : vector<1x8x64xf32> to vector<8x64xf32>
    %168 = arith.addf %164, %167 : vector<8x64xf32>
    %169 = arith.index_cast %c7_i32 : i32 to index
    %c0_75 = arith.constant 0 : index
    %c0_76 = arith.constant 0 : index
    %170 = vector.load %arg15[%169, %c0_75, %c0_76] : memref<8x8x64xf32, #tpu.memory_space<vmem>>, vector<1x8x64xf32>
    %171 = vector.shape_cast %170 : vector<1x8x64xf32> to vector<8x64xf32>
    %172 = vector.shape_cast %168 : vector<8x64xf32> to vector<1x8x64xf32>
    tpu.vector_store %arg15[%169, %c0_75, %c0_76], %172 {strides = array<i32>} : memref<8x8x64xf32, #tpu.memory_space<vmem>>, vector<1x8x64xf32>,
    %c8_i32 = arith.constant 8 : i32
    %173 = vector.shape_cast %63 : vector<8x8xf32> to vector<8x8x1xf32>
    %c0_77 = arith.constant 0 : index
    %c0_78 = arith.constant 0 : index
    %c0_79 = arith.constant 0 : index
    %174 = vector.load %arg15[%c0_77, %c0_78, %c0_79] : memref<8x8x64xf32, #tpu.memory_space<vmem>>, vector<8x8x64xf32>
    %175 = vector.broadcast %173 : vector<8x8x1xf32> to vector<8x8x64xf32>
    %176 = arith.mulf %175, %174 : vector<8x8x64xf32>
    %cst_80 = arith.constant dense<0.000000e+00> : vector<8x64xf32>
    %177 = vector.multi_reduction <add>, %176, %cst_80 [1] : vector<8x8x64xf32> to vector<8x64xf32>
    %c0_81 = arith.constant 0 : index
    %c0_82 = arith.constant 0 : index
    %178 = vector.load %arg16[%c0_81, %c0_82] : memref<8x64xf32, #tpu.memory_space<vmem>>, vector<8x64xf32>
    tpu.vector_store %arg16[%c0_81, %c0_82], %177 {strides = array<i32>} : memref<8x64xf32, #tpu.memory_space<vmem>>, vector<8x64xf32>,
    %c0_83 = arith.constant 0 : index
    %c0_84 = arith.constant 0 : index
    %179 = vector.load %arg16[%c0_83, %c0_84] : memref<8x64xf32, #tpu.memory_space<vmem>>, vector<8x64xf32>
    %c0_85 = arith.constant 0 : index
    %c0_86 = arith.constant 0 : index
    %180 = vector.load %arg8[%c0_85, %c0_86] : memref<1x64xf32, #tpu.memory_space<vmem>>, vector<1x64xf32>
    %181 = vector.broadcast %180 : vector<1x64xf32> to vector<8x64xf32>
    %182 = arith.mulf %181, %36 : vector<8x64xf32>
    %183 = arith.addf %179, %182 : vector<8x64xf32>
    %184 = arith.negf %6 : vector<8x64xf32>
    %185 = math.exp %184 : vector<8x64xf32>
    %cst_87 = arith.constant 1.000000e+00 : f32
    %186 = vector.broadcast %cst_87 : f32 to vector<8x64xf32>
    %187 = arith.addf %186, %185 : vector<8x64xf32>
    %188 = arith.divf %186, %187 : vector<8x64xf32>
    %189 = arith.mulf %6, %188 : vector<8x64xf32>
    %190 = arith.mulf %183, %189 : vector<8x64xf32>
    %191 = arith.truncf %190 : vector<8x64xf32> to vector<8x64xbf16>
    %c0_88 = arith.constant 0 : index
    %c0_89 = arith.constant 0 : index
    %192 = vector.load %arg9[%c0_88, %c0_89] : memref<64x32xbf16, #tpu.memory_space<vmem>>, vector<64x32xbf16>
    %cst_90 = arith.constant dense<0.000000e+00> : vector<8x32xf32>
    %193 = tpu.matmul %191, %192, %cst_90 {dimension_numbers = #tpu.dot_dimension_numbers<[1], [0], [0], [1], [0, 0, 1, 1], [], []>} : vector<8x64xbf16>, vector<64x32xbf16>, vector<8x32xf32> -> vector<8x32xf32>
    %194 = arith.addf %1, %193 : vector<8x32xf32>
    %cst_91 = arith.constant dense<0.000000e+00> : vector<8xf32>
    %195 = vector.multi_reduction <add>, %194, %cst_91 [1] : vector<8x32xf32> to vector<8xf32>
    %196 = vector.shape_cast %195 : vector<8xf32> to vector<8x1xf32>
    %cst_92 = arith.constant 3.200000e+01 : f32
    %197 = vector.broadcast %cst_92 : f32 to vector<8x1xf32>
    %198 = arith.divf %196, %197 : vector<8x1xf32>
    %199 = vector.broadcast %198 : vector<8x1xf32> to vector<8x32xf32>
    %200 = arith.subf %194, %199 : vector<8x32xf32>
    %201 = arith.mulf %200, %200 : vector<8x32xf32>
    %cst_93 = arith.constant dense<0.000000e+00> : vector<8xf32>
    %202 = vector.multi_reduction <add>, %201, %cst_93 [1] : vector<8x32xf32> to vector<8xf32>
    %203 = vector.shape_cast %202 : vector<8xf32> to vector<8x1xf32>
    %cst_94 = arith.constant 3.200000e+01 : f32
    %204 = vector.broadcast %cst_94 : f32 to vector<8x1xf32>
    %205 = arith.divf %203, %204 : vector<8x1xf32>
    %206 = vector.broadcast %198 : vector<8x1xf32> to vector<8x32xf32>
    %207 = arith.subf %194, %206 : vector<8x32xf32>
    %cst_95 = arith.constant 9.99999974E-6 : f32
    %208 = vector.broadcast %cst_95 : f32 to vector<8x1xf32>
    %209 = arith.addf %205, %208 : vector<8x1xf32>
    %210 = math.rsqrt %209 : vector<8x1xf32>
    %211 = vector.broadcast %210 : vector<8x1xf32> to vector<8x32xf32>
    %212 = arith.mulf %207, %211 : vector<8x32xf32>
    %c0_96 = arith.constant 0 : index
    %c0_97 = arith.constant 0 : index
    %213 = vector.load %arg10[%c0_96, %c0_97] : memref<1x32xf32, #tpu.memory_space<vmem>>, vector<1x32xf32>
    %214 = vector.broadcast %213 : vector<1x32xf32> to vector<8x32xf32>
    %215 = arith.mulf %212, %214 : vector<8x32xf32>
    %c0_98 = arith.constant 0 : index
    %c0_99 = arith.constant 0 : index
    %216 = vector.load %arg11[%c0_98, %c0_99] : memref<1x32xf32, #tpu.memory_space<vmem>>, vector<1x32xf32>
    %217 = vector.broadcast %216 : vector<1x32xf32> to vector<8x32xf32>
    %218 = arith.addf %215, %217 : vector<8x32xf32>
    %c0_100 = arith.constant 0 : index
    %c0_101 = arith.constant 0 : index
    %c0_102 = arith.constant 0 : index
    %219 = vector.load %arg12[%c0_100, %c0_101, %c0_102] : memref<1x8x32xf32, #tpu.memory_space<vmem>>, vector<1x8x32xf32>
    %220 = vector.shape_cast %219 : vector<1x8x32xf32> to vector<8x32xf32>
    %221 = vector.shape_cast %218 : vector<8x32xf32> to vector<1x8x32xf32>
    tpu.vector_store %arg12[%c0_100, %c0_101, %c0_102], %221 {strides = array<i32>} : memref<1x8x32xf32, #tpu.memory_space<vmem>>, vector<1x8x32xf32>,
    return
  }
  func.func @transform_0(%arg0: i32) -> (i32, i32, i32) {
    %c0_i32 = arith.constant 0 : i32
    %c0_i32_0 = arith.constant 0 : i32
    %c0_i32_1 = arith.constant 0 : i32
    return %arg0, %c0_i32, %c0_i32_0 : i32, i32, i32
  }
  func.func @transform_1(%arg0: i32) -> (i32, i32) {
    %c0_i32 = arith.constant 0 : i32
    %c0_i32_0 = arith.constant 0 : i32
    %c0_i32_1 = arith.constant 0 : i32
    return %c0_i32, %c0_i32_0 : i32, i32
  }
  func.func @transform_2(%arg0: i32) -> (i32, i32) {
    %c0_i32 = arith.constant 0 : i32
    %c0_i32_0 = arith.constant 0 : i32
    %c0_i32_1 = arith.constant 0 : i32
    return %c0_i32, %c0_i32_0 : i32, i32
  }
  func.func @transform_3(%arg0: i32) -> (i32, i32) {
    %c0_i32 = arith.constant 0 : i32
    %c0_i32_0 = arith.constant 0 : i32
    %c0_i32_1 = arith.constant 0 : i32
    return %c0_i32, %c0_i32_0 : i32, i32
  }
  func.func @transform_4(%arg0: i32) -> (i32, i32) {
    %c0_i32 = arith.constant 0 : i32
    %c0_i32_0 = arith.constant 0 : i32
    %c0_i32_1 = arith.constant 0 : i32
    return %c0_i32, %c0_i32_0 : i32, i32
  }
  func.func @transform_5(%arg0: i32) -> (i32, i32) {
    %c0_i32 = arith.constant 0 : i32
    %c0_i32_0 = arith.constant 0 : i32
    %c0_i32_1 = arith.constant 0 : i32
    return %c0_i32, %c0_i32_0 : i32, i32
  }
  func.func @transform_6(%arg0: i32) -> (i32, i32) {
    %c0_i32 = arith.constant 0 : i32
    %c0_i32_0 = arith.constant 0 : i32
    %c0_i32_1 = arith.constant 0 : i32
    return %c0_i32, %c0_i32_0 : i32, i32
  }
  func.func @transform_7(%arg0: i32) -> (i32, i32) {
    %c0_i32 = arith.constant 0 : i32
    %c0_i32_0 = arith.constant 0 : i32
    %c0_i32_1 = arith.constant 0 : i32
    return %c0_i32, %c0_i32_0 : i32, i32
  }
  func.func @transform_8(%arg0: i32) -> (i32, i32) {
    %c0_i32 = arith.constant 0 : i32
    %c0_i32_0 = arith.constant 0 : i32
    %c0_i32_1 = arith.constant 0 : i32
    return %c0_i32, %c0_i32_0 : i32, i32
  }
  func.func @transform_9(%arg0: i32) -> (i32, i32) {
    %c0_i32 = arith.constant 0 : i32
    %c0_i32_0 = arith.constant 0 : i32
    %c0_i32_1 = arith.constant 0 : i32
    return %c0_i32, %c0_i32_0 : i32, i32
  }
  func.func @transform_10(%arg0: i32) -> (i32, i32) {
    %c0_i32 = arith.constant 0 : i32
    %c0_i32_0 = arith.constant 0 : i32
    %c0_i32_1 = arith.constant 0 : i32
    return %c0_i32, %c0_i32_0 : i32, i32
  }
  func.func @transform_11(%arg0: i32) -> (i32, i32, i32) {
    %c0_i32 = arith.constant 0 : i32
    %c0_i32_0 = arith.constant 0 : i32
    %c0_i32_1 = arith.constant 0 : i32
    return %arg0, %c0_i32, %c0_i32_0 : i32, i32, i32
  }
}

</mosaic_0001>

<llo_original>
// kernel: tpu_custom_call.1
$region0: #{tpu_custom_call.1}
  #allocation0 [shape = 'u32[]', space=smem, size = 0x4, offset = 0x4, fixed_abs, tag = 'smem constant byte address 0x4 - core index']
  #allocation1 [shape = 'u32[144,128]{1,0:T(1,128)}', space=vmem, size = 0x12000, scoped, tag = 'internal scratch']
  #allocation2 [shape = 'f32[8,8,64]{2,1,0:T(8,128)}', space=vmem, size = 0x8000, scoped, tag = 'scratch operand']
  #allocation3 [shape = 'f32[8,8,64]{2,1,0:T(8,128)}', space=vmem, size = 0x8000, scoped, tag = 'scratch operand']
  #allocation4 [shape = 'f32[8,8,64]{2,1,0:T(8,128)}', space=vmem, size = 0x8000, scoped, tag = 'scratch operand']
  #allocation5 [shape = 'f32[8,64]{1,0:T(8,128)}', space=vmem, size = 0x1000, scoped, tag = 'scratch operand']
  %s0 = inlined_call_operand.vmem [shape: f32[2,8,32], index: 0, kind: input, shape index: {}]
  %s1 = inlined_call_operand.hbm [shape: bf16[32,128], index: 1, kind: input, shape index: {}]
  %s2 = inlined_call_operand.hbm [shape: f32[4,64], index: 2, kind: input, shape index: {}]
  %s3 = inlined_call_operand.vmem [shape: f32[1,64], index: 3, kind: input, shape index: {}]
  %s4 = inlined_call_operand.vmem [shape: bf16[64,80], index: 4, kind: input, shape index: {}]
  %s5 = inlined_call_operand.hbm [shape: f32[1,64], index: 5, kind: input, shape index: {}]
  %s6 = inlined_call_operand.vmem [shape: f32[8,64], index: 6, kind: input, shape index: {}]
  %s7 = inlined_call_operand.vmem [shape: f32[1,64], index: 7, kind: input, shape index: {}]
  %s8 = inlined_call_operand.vmem [shape: bf16[64,32], index: 8, kind: input, shape index: {}]
  %s9 = inlined_call_operand.vmem [shape: f32[1,32], index: 9, kind: input, shape index: {}]
  %s10 = inlined_call_operand.vmem [shape: f32[1,32], index: 10, kind: input, shape index: {}]
  %s11 = inlined_call_operand.hbm [shape: f32[2,8,32], index: 11, kind: output, shape index: {}]
  %s12 = sld [smem:[#allocation0]]
  $region89: #{tpu_custom_call.1} parent=0
    _
  %s14 = ssub.s32 1, %s12
  %s15 = scalar_select 0, %s14, %s12
  $region1: #{tpu_custom_call.1} parent=0
    #allocation6 [shape = 'u8[8192]{0}', space=vmem, size = 0x2000, scoped, tag = 'input window, operand 1, single buffered']
    #allocation7 [shape = 's32[2]{0}', space=sflag, size = 0x8, scoped, tag = 'scoped memory for tpu_custom_call.1']
    #allocation8 [shape = 's32[2]{0}', space=sflag, size = 0x8, scoped, tag = 'scoped memory for tpu_custom_call.1']
    #allocation9 [shape = 'u8[2048]{0}', space=vmem, size = 0x800, scoped, tag = 'input window, operand 2, single buffered']
    #allocation10 [shape = 's32[1]{0}', space=sflag, size = 0x4, scoped, tag = 'scoped memory for tpu_custom_call.1']
    #allocation11 [shape = 'u8[512]{0}', space=vmem, size = 0x400, scoped, tag = 'input window, operand 5, single buffered']
    #allocation12 [shape = 'u8[8192]{0}', space=vmem, size = 0x2000, scoped, tag = 'output window, operand 0']
    %16 = vsyncpa [#allocation7], 0
    %17 = vsyncpa [#allocation10], 0
    %18 = vsyncpa [#allocation8], 0
    %s19 = scalar_lea.sflag [#allocation8], 1
    %20 = vsyncpa %s19, 0
    loop: start=0, step=1, limit=4
    $region2: #{tpu_custom_call.1} parent=1 // loop_pre_header
      _
    $region3: #{tpu_custom_call.1} parent=1 // loop_header
      %s22 = sphi 0, %s26
      %p23 = scmp.ge.s32.totalorder %s22, 4
      %s32 = sphi 0, %s34
      %s35 = sphi 0, %s32
      %s36 = sphi 0, %s35
      %s52 = sphi 0, %s36
      %s56 = sphi 0, %s56
      %s58 = sphi 0, %s56
      %s59 = sphi 0, %s58
      %s73 = sphi 0, %s59
      %s77 = sphi 0, %s77
      %s79 = sphi 0, %s77
      %s80 = sphi 0, %s79
      %s94 = sphi 0, %s80
      %s98 = sphi 0, %s98
      %s100 = sphi 0, %s98
      %s101 = sphi 0, %s100
      %s115 = sphi 0, %s101
      %s119 = sphi 0, %s119
      %s121 = sphi 0, %s119
      %s122 = sphi 0, %s121
      %s136 = sphi 0, %s122
      %s140 = sphi 0, %s140
      %s142 = sphi 0, %s140
      %s143 = sphi 0, %s142
      %s157 = sphi 0, %s143
      %s161 = sphi 0, %s161
      %s163 = sphi 0, %s161
      %s164 = sphi 0, %s163
      %s178 = sphi 0, %s164
      %s182 = sphi 0, %s182
      %s184 = sphi 0, %s182
      %s185 = sphi 0, %s184
      %s199 = sphi 0, %s185
      %s203 = sphi 0, %s203
      %s205 = sphi 0, %s203
      %s206 = sphi 0, %s205
      %s220 = sphi 0, %s206
      %s224 = sphi 0, %s224
      %s226 = sphi 0, %s224
      %s227 = sphi 0, %s226
      %s241 = sphi 0, %s227
      %s245 = sphi 0, %s245
      %s247 = sphi 0, %s245
      %s248 = sphi 0, %s247
      %s262 = sphi 0, %s248
      %s268 = sphi 0, %s270
      %s271 = sphi 0, %s268
      %s272 = sphi 0, %s271
      %s288 = sphi 0, %s272
    $region4: #{tpu_custom_call.1} parent=1 // loop_header_branch
      %25 = sbr.rel (%p23) target = $region8
    $region5: #{tpu_custom_call.1} parent=1 // loop_body
      %s27 = ssub.s32 %s22, 1
      %s28 = ssub.s32 %s22, 2
      %s29 = sadd.s32 %s22, 1
      %s30 = ssub.s32 %s22, %s29
      %p31 = scmp.eq.s32.totalorder %s30, 0
      %s33 = sadd.s32 %s32, 1
      %s34 = scalar_select %p31, %s32, %s33
      %p37 = pneg %p31
      %p38 = scmp.eq.s32.totalorder %s22, 1
      %p39 = por %p37, %p38
      %p40 = scmp.ne.s32.totalorder %s32, %s35
      %p41 = scmp.eq.s32.totalorder %s22, 0
      %p42 = por %p40, %p41
      %p43 = scmp.ne.s32.totalorder %s32, %s35
      %p44 = scmp.eq.s32.totalorder %s27, 1
      %p45 = por %p43, %p44
      %p46 = scmp.ne.s32.totalorder %s35, %s36
      %p47 = scmp.eq.s32.totalorder %s27, 0
      %p48 = por %p46, %p47
      %p49 = scmp.ne.s32.totalorder %s35, %s36
      %p50 = scmp.eq.s32.totalorder %s28, 1
      %p51 = por %p49, %p50
      %p53 = scmp.ne.s32.totalorder %s36, %s52
      %p54 = scmp.eq.s32.totalorder %s28, 0
      %p55 = por %p53, %p54
      %s57 = sadd.s32 %s56, 1
      %p60 = scmp.eq.s32.totalorder %s22, 1
      %p61 = scmp.ne.s32.totalorder %s56, %s58
      %p62 = scmp.eq.s32.totalorder %s22, 0
      %p63 = por %p61, %p62
      %p64 = scmp.ne.s32.totalorder %s56, %s58
      %p65 = scmp.eq.s32.totalorder %s27, 1
      %p66 = por %p64, %p65
      %p67 = scmp.ne.s32.totalorder %s58, %s59
      %p68 = scmp.eq.s32.totalorder %s27, 0
      %p69 = por %p67, %p68
      %p70 = scmp.ne.s32.totalorder %s58, %s59
      %p71 = scmp.eq.s32.totalorder %s28, 1
      %p72 = por %p70, %p71
      %p74 = scmp.ne.s32.totalorder %s59, %s73
      %p75 = scmp.eq.s32.totalorder %s28, 0
      %p76 = por %p74, %p75
      %s78 = sadd.s32 %s77, 1
      %p81 = scmp.eq.s32.totalorder %s22, 1
      %p82 = scmp.ne.s32.totalorder %s77, %s79
      %p83 = scmp.eq.s32.totalorder %s22, 0
      %p84 = por %p82, %p83
      %p85 = scmp.ne.s32.totalorder %s77, %s79
      %p86 = scmp.eq.s32.totalorder %s27, 1
      %p87 = por %p85, %p86
      %p88 = scmp.ne.s32.totalorder %s79, %s80
      %p89 = scmp.eq.s32.totalorder %s27, 0
      %p90 = por %p88, %p89
      %p91 = scmp.ne.s32.totalorder %s79, %s80
      %p92 = scmp.eq.s32.totalorder %s28, 1
      %p93 = por %p91, %p92
      %p95 = scmp.ne.s32.totalorder %s80, %s94
      %p96 = scmp.eq.s32.totalorder %s28, 0
      %p97 = por %p95, %p96
      %s99 = sadd.s32 %s98, 1
      %p102 = scmp.eq.s32.totalorder %s22, 1
      %p103 = scmp.ne.s32.totalorder %s98, %s100
      %p104 = scmp.eq.s32.totalorder %s22, 0
      %p105 = por %p103, %p104
      %p106 = scmp.ne.s32.totalorder %s98, %s100
      %p107 = scmp.eq.s32.totalorder %s27, 1
      %p108 = por %p106, %p107
      %p109 = scmp.ne.s32.totalorder %s100, %s101
      %p110 = scmp.eq.s32.totalorder %s27, 0
      %p111 = por %p109, %p110
      %p112 = scmp.ne.s32.totalorder %s100, %s101
      %p113 = scmp.eq.s32.totalorder %s28, 1
      %p114 = por %p112, %p113
      %p116 = scmp.ne.s32.totalorder %s101, %s115
      %p117 = scmp.eq.s32.totalorder %s28, 0
      %p118 = por %p116, %p117
      %s120 = sadd.s32 %s119, 1
      %p123 = scmp.eq.s32.totalorder %s22, 1
      %p124 = scmp.ne.s32.totalorder %s119, %s121
      %p125 = scmp.eq.s32.totalorder %s22, 0
      %p126 = por %p124, %p125
      %p127 = scmp.ne.s32.totalorder %s119, %s121
      %p128 = scmp.eq.s32.totalorder %s27, 1
      %p129 = por %p127, %p128
      %p130 = scmp.ne.s32.totalorder %s121, %s122
      %p131 = scmp.eq.s32.totalorder %s27, 0
      %p132 = por %p130, %p131
      %p133 = scmp.ne.s32.totalorder %s121, %s122
      %p134 = scmp.eq.s32.totalorder %s28, 1
      %p135 = por %p133, %p134
      %p137 = scmp.ne.s32.totalorder %s122, %s136
      %p138 = scmp.eq.s32.totalorder %s28, 0
      %p139 = por %p137, %p138
      %s141 = sadd.s32 %s140, 1
      %p144 = scmp.eq.s32.totalorder %s22, 1
      %p145 = scmp.ne.s32.totalorder %s140, %s142
      %p146 = scmp.eq.s32.totalorder %s22, 0
      %p147 = por %p145, %p146
      %p148 = scmp.ne.s32.totalorder %s140, %s142
      %p149 = scmp.eq.s32.totalorder %s27, 1
      %p150 = por %p148, %p149
      %p151 = scmp.ne.s32.totalorder %s142, %s143
      %p152 = scmp.eq.s32.totalorder %s27, 0
      %p153 = por %p151, %p152
      %p154 = scmp.ne.s32.totalorder %s142, %s143
      %p155 = scmp.eq.s32.totalorder %s28, 1
      %p156 = por %p154, %p155
      %p158 = scmp.ne.s32.totalorder %s143, %s157
      %p159 = scmp.eq.s32.totalorder %s28, 0
      %p160 = por %p158, %p159
      %s162 = sadd.s32 %s161, 1
      %p165 = scmp.eq.s32.totalorder %s22, 1
      %p166 = scmp.ne.s32.totalorder %s161, %s163
      %p167 = scmp.eq.s32.totalorder %s22, 0
      %p168 = por %p166, %p167
      %p169 = scmp.ne.s32.totalorder %s161, %s163
      %p170 = scmp.eq.s32.totalorder %s27, 1
      %p171 = por %p169, %p170
      %p172 = scmp.ne.s32.totalorder %s163, %s164
      %p173 = scmp.eq.s32.totalorder %s27, 0
      %p174 = por %p172, %p173
      %p175 = scmp.ne.s32.totalorder %s163, %s164
      %p176 = scmp.eq.s32.totalorder %s28, 1
      %p177 = por %p175, %p176
      %p179 = scmp.ne.s32.totalorder %s164, %s178
      %p180 = scmp.eq.s32.totalorder %s28, 0
      %p181 = por %p179, %p180
      %s183 = sadd.s32 %s182, 1
      %p186 = scmp.eq.s32.totalorder %s22, 1
      %p187 = scmp.ne.s32.totalorder %s182, %s184
      %p188 = scmp.eq.s32.totalorder %s22, 0
      %p189 = por %p187, %p188
      %p190 = scmp.ne.s32.totalorder %s182, %s184
      %p191 = scmp.eq.s32.totalorder %s27, 1
      %p192 = por %p190, %p191
      %p193 = scmp.ne.s32.totalorder %s184, %s185
      %p194 = scmp.eq.s32.totalorder %s27, 0
      %p195 = por %p193, %p194
      %p196 = scmp.ne.s32.totalorder %s184, %s185
      %p197 = scmp.eq.s32.totalorder %s28, 1
      %p198 = por %p196, %p197
      %p200 = scmp.ne.s32.totalorder %s185, %s199
      %p201 = scmp.eq.s32.totalorder %s28, 0
      %p202 = por %p200, %p201
      %s204 = sadd.s32 %s203, 1
      %p207 = scmp.eq.s32.totalorder %s22, 1
      %p208 = scmp.ne.s32.totalorder %s203, %s205
      %p209 = scmp.eq.s32.totalorder %s22, 0
      %p210 = por %p208, %p209
      %p211 = scmp.ne.s32.totalorder %s203, %s205
      %p212 = scmp.eq.s32.totalorder %s27, 1
      %p213 = por %p211, %p212
      %p214 = scmp.ne.s32.totalorder %s205, %s206
      %p215 = scmp.eq.s32.totalorder %s27, 0
      %p216 = por %p214, %p215
      %p217 = scmp.ne.s32.totalorder %s205, %s206
      %p218 = scmp.eq.s32.totalorder %s28, 1
      %p219 = por %p217, %p218
      %p221 = scmp.ne.s32.totalorder %s206, %s220
      %p222 = scmp.eq.s32.totalorder %s28, 0
      %p223 = por %p221, %p222
      %s225 = sadd.s32 %s224, 1
      %p228 = scmp.eq.s32.totalorder %s22, 1
      %p229 = scmp.ne.s32.totalorder %s224, %s226
      %p230 = scmp.eq.s32.totalorder %s22, 0
      %p231 = por %p229, %p230
      %p232 = scmp.ne.s32.totalorder %s224, %s226
      %p233 = scmp.eq.s32.totalorder %s27, 1
      %p234 = por %p232, %p233
      %p235 = scmp.ne.s32.totalorder %s226, %s227
      %p236 = scmp.eq.s32.totalorder %s27, 0
      %p237 = por %p235, %p236
      %p238 = scmp.ne.s32.totalorder %s226, %s227
      %p239 = scmp.eq.s32.totalorder %s28, 1
      %p240 = por %p238, %p239
      %p242 = scmp.ne.s32.totalorder %s227, %s241
      %p243 = scmp.eq.s32.totalorder %s28, 0
      %p244 = por %p242, %p243
      %s246 = sadd.s32 %s245, 1
      %p249 = scmp.eq.s32.totalorder %s22, 1
      %p250 = scmp.ne.s32.totalorder %s245, %s247
      %p251 = scmp.eq.s32.totalorder %s22, 0
      %p252 = por %p250, %p251
      %p253 = scmp.ne.s32.totalorder %s245, %s247
      %p254 = scmp.eq.s32.totalorder %s27, 1
      %p255 = por %p253, %p254
      %p256 = scmp.ne.s32.totalorder %s247, %s248
      %p257 = scmp.eq.s32.totalorder %s27, 0
      %p258 = por %p256, %p257
      %p259 = scmp.ne.s32.totalorder %s247, %s248
      %p260 = scmp.eq.s32.totalorder %s28, 1
      %p261 = por %p259, %p260
      %p263 = scmp.ne.s32.totalorder %s248, %s262
      %p264 = scmp.eq.s32.totalorder %s28, 0
      %p265 = por %p263, %p264
      %s266 = ssub.s32 %s22, %s29
      %p267 = scmp.eq.s32.totalorder %s266, 0
      %s269 = sadd.s32 %s268, 1
      %s270 = scalar_select %p267, %s268, %s269
      %p273 = pneg %p267
      %p274 = scmp.eq.s32.totalorder %s22, 1
      %p275 = por %p273, %p274
      %p276 = scmp.ne.s32.totalorder %s268, %s271
      %p277 = scmp.eq.s32.totalorder %s22, 0
      %p278 = por %p276, %p277
      %p279 = scmp.ne.s32.totalorder %s268, %s271
      %p280 = scmp.eq.s32.totalorder %s27, 1
      %p281 = por %p279, %p280
      %p282 = scmp.ne.s32.totalorder %s271, %s272
      %p283 = scmp.eq.s32.totalorder %s27, 0
      %p284 = por %p282, %p283
      %p285 = scmp.ne.s32.totalorder %s271, %s272
      %p286 = scmp.eq.s32.totalorder %s28, 1
      %p287 = por %p285, %p286
      %p289 = scmp.ne.s32.totalorder %s272, %s288
      %p290 = scmp.eq.s32.totalorder %s28, 0
      %p291 = por %p289, %p290
      %p292 = scmp.le.s32.totalorder 1, %s22
      %p293 = scmp.lt.s32.totalorder %s22, 3
      %p294 = pnand %p292, %p293
      %p295 = pneg %p294
      // Predicated region
      $region9: #{tpu_custom_call.1} parent=5 // pred_check
        _
      $region10: #{tpu_custom_call.1} parent=5 // pred_check_branch
        %297 = sbr.rel (%p294) target = $region12
      $region11: #{tpu_custom_call.1} parent=5 // pred_region
        %s298 = ssub.s32 %s22, 1
        // Predicated region
        $region13: #{tpu_custom_call.1} parent=11 // pred_check
          %p299 = pneg %p69
        $region14: #{tpu_custom_call.1} parent=11 // pred_check_branch
          %301 = sbr.rel (%p299) target = $region16
        $region15: #{tpu_custom_call.1} parent=11 // pred_region
          %s303 = ssub.s32 256, 256
          %304 = vsyncadd [#allocation7], %s303
          %s305 = sshll.u32 [#allocation6], 4
          %s306 = int_to_ptr.vmem [resolvable:$true] %s305
          %311 = dma.hbm_to_vmem [thread:$0]  %s1, 256, %s306, [#allocation7], 64, 64, 4
        $region16: #{tpu_custom_call.1} parent=11 // pred_fallthru
          _
        // Predicated region
        $region17: #{tpu_custom_call.1} parent=11 // pred_check
          %p312 = pneg %p90
        $region18: #{tpu_custom_call.1} parent=11 // pred_check_branch
          %314 = sbr.rel (%p312) target = $region20
        $region19: #{tpu_custom_call.1} parent=11 // pred_region
          %s316 = ssub.s32 64, 64
          %317 = vsyncadd [#allocation10], %s316
          %s319 = sshll.u32 [#allocation9], 4
          %s320 = int_to_ptr.vmem [resolvable:$true] %s319
          %322 = dma.hbm_to_vmem [thread:$0]  %s2, 64, %s320, [#allocation10]
        $region20: #{tpu_custom_call.1} parent=11 // pred_fallthru
          _
        // Predicated region
        $region21: #{tpu_custom_call.1} parent=11 // pred_check
          %p323 = pneg %p111
        $region22: #{tpu_custom_call.1} parent=11 // pred_check_branch
          %325 = sbr.rel (%p323) target = $region24
        $region23: #{tpu_custom_call.1} parent=11 // pred_region
          _
        $region24: #{tpu_custom_call.1} parent=11 // pred_fallthru
          _
        // Predicated region
        $region25: #{tpu_custom_call.1} parent=11 // pred_check
          %p326 = pneg %p132
        $region26: #{tpu_custom_call.1} parent=11 // pred_check_branch
          %328 = sbr.rel (%p326) target = $region28
        $region27: #{tpu_custom_call.1} parent=11 // pred_region
          _
        $region28: #{tpu_custom_call.1} parent=11 // pred_fallthru
          _
        // Predicated region
        $region29: #{tpu_custom_call.1} parent=11 // pred_check
          %p329 = pneg %p153
        $region30: #{tpu_custom_call.1} parent=11 // pred_check_branch
          %331 = sbr.rel (%p329) target = $region32
        $region31: #{tpu_custom_call.1} parent=11 // pred_region
          %s333 = ssub.s32 16, 16
          %334 = vsyncadd [#allocation10], %s333
          %s336 = sshll.u32 [#allocation11], 4
          %s337 = int_to_ptr.vmem [resolvable:$true] %s336
          %339 = dma.hbm_to_vmem [thread:$0]  %s5, 16, %s337, [#allocation10]
        $region32: #{tpu_custom_call.1} parent=11 // pred_fallthru
          _
        // Predicated region
        $region33: #{tpu_custom_call.1} parent=11 // pred_check
          %p340 = pneg %p174
        $region34: #{tpu_custom_call.1} parent=11 // pred_check_branch
          %342 = sbr.rel (%p340) target = $region36
        $region35: #{tpu_custom_call.1} parent=11 // pred_region
          _
        $region36: #{tpu_custom_call.1} parent=11 // pred_fallthru
          _
        // Predicated region
        $region37: #{tpu_custom_call.1} parent=11 // pred_check
          %p343 = pneg %p195
        $region38: #{tpu_custom_call.1} parent=11 // pred_check_branch
          %345 = sbr.rel (%p343) target = $region40
        $region39: #{tpu_custom_call.1} parent=11 // pred_region
          _
        $region40: #{tpu_custom_call.1} parent=11 // pred_fallthru
          _
        // Predicated region
        $region41: #{tpu_custom_call.1} parent=11 // pred_check
          %p346 = pneg %p216
        $region42: #{tpu_custom_call.1} parent=11 // pred_check_branch
          %348 = sbr.rel (%p346) target = $region44
        $region43: #{tpu_custom_call.1} parent=11 // pred_region
          _
        $region44: #{tpu_custom_call.1} parent=11 // pred_fallthru
          _
        // Predicated region
        $region45: #{tpu_custom_call.1} parent=11 // pred_check
          %p349 = pneg %p237
        $region46: #{tpu_custom_call.1} parent=11 // pred_check_branch
          %351 = sbr.rel (%p349) target = $region48
        $region47: #{tpu_custom_call.1} parent=11 // pred_region
          _
        $region48: #{tpu_custom_call.1} parent=11 // pred_fallthru
          _
        // Predicated region
        $region49: #{tpu_custom_call.1} parent=11 // pred_check
          %p352 = pneg %p258
        $region50: #{tpu_custom_call.1} parent=11 // pred_check_branch
          %354 = sbr.rel (%p352) target = $region52
        $region51: #{tpu_custom_call.1} parent=11 // pred_region
          _
        $region52: #{tpu_custom_call.1} parent=11 // pred_fallthru
          _
      $region12: #{tpu_custom_call.1} parent=5 // pred_fallthru
        _
      %p355 = scmp.lt.s32.totalorder %s22, 2
      // Predicated region
      $region53: #{tpu_custom_call.1} parent=5 // pred_check
        %p356 = pneg %p355
      $region54: #{tpu_custom_call.1} parent=5 // pred_check_branch
        %358 = sbr.rel (%p356) target = $region56
      $region55: #{tpu_custom_call.1} parent=5 // pred_region
        // Predicated region
        $region57: #{tpu_custom_call.1} parent=55 // pred_check
          %p359 = pneg %p42
        $region58: #{tpu_custom_call.1} parent=55 // pred_check_branch
          %361 = sbr.rel (%p359) target = $region60
        $region59: #{tpu_custom_call.1} parent=55 // pred_region
          %p362 = scmp.lt.s32.totalorder %s22, 1
          %s363 = scalar_select %p362, %s22, 1
          %s364 = smul.addr %s363, 8
          %s365 = scalar_lea.vmem %s0, %s364
        $region60: #{tpu_custom_call.1} parent=55 // pred_fallthru
          _
      $region56: #{tpu_custom_call.1} parent=5 // pred_fallthru
        _
      %p366 = scmp.le.s32.totalorder 1, %s22
      %p367 = scmp.lt.s32.totalorder %s22, 3
      %p368 = pnand %p366, %p367
      %p369 = pneg %p368
      // Predicated region
      $region61: #{tpu_custom_call.1} parent=5 // pred_check
        _
      $region62: #{tpu_custom_call.1} parent=5 // pred_check_branch
        %371 = sbr.rel (%p368) target = $region64
      $region63: #{tpu_custom_call.1} parent=5 // pred_region
        %s372 = ssub.s32 %s22, 1
        // Predicated region
        $region65: #{tpu_custom_call.1} parent=63 // pred_check
          %p373 = pneg %p69
        $region66: #{tpu_custom_call.1} parent=63 // pred_check_branch
          %375 = sbr.rel (%p373) target = $region68
        $region67: #{tpu_custom_call.1} parent=63 // pred_region
          %376 = dma.done [#allocation7], 256
        $region68: #{tpu_custom_call.1} parent=63 // pred_fallthru
          _
        // Predicated region
        $region69: #{tpu_custom_call.1} parent=63 // pred_check
          %p377 = pneg %p90
        $region70: #{tpu_custom_call.1} parent=63 // pred_check_branch
          %379 = sbr.rel (%p377) target = $region72
        $region71: #{tpu_custom_call.1} parent=63 // pred_region
          %380 = dma.done [#allocation10], 64
        $region72: #{tpu_custom_call.1} parent=63 // pred_fallthru
          _
        // Predicated region
        $region73: #{tpu_custom_call.1} parent=63 // pred_check
          %p381 = pneg %p153
        $region74: #{tpu_custom_call.1} parent=63 // pred_check_branch
          %383 = sbr.rel (%p381) target = $region76
        $region75: #{tpu_custom_call.1} parent=63 // pred_region
          %384 = dma.done [#allocation10], 16
        $region76: #{tpu_custom_call.1} parent=63 // pred_fallthru
          _
        %p385 = scmp.lt.s32.totalorder %s27, 1
        %s386 = scalar_select %p385, %s27, 1
        %s387 = smul.addr %s386, 8
        %s388 = scalar_lea.vmem %s0, %s387
        %p389 = pneg %p48
        %p390 = pneg %p45
        %p391 = pneg %p69
        %p392 = pneg %p66
        %p393 = pneg %p90
        %p394 = pneg %p87
        %p395 = pneg %p111
        %p396 = pneg %p108
        %p397 = pneg %p132
        %p398 = pneg %p129
        %p399 = pneg %p153
        %p400 = pneg %p150
        %p401 = pneg %p174
        %p402 = pneg %p171
        %p403 = pneg %p195
        %p404 = pneg %p192
        %p405 = pneg %p216
        %p406 = pneg %p213
        %p407 = pneg %p237
        %p408 = pneg %p234
        %p409 = pneg %p258
        %p410 = pneg %p255
        %p411 = pneg %p284
        %p412 = pneg %p281
        %s413 = sand.u32 %s271, 1
        %s414 = scalar_lea.sflag [#allocation8], %s413
        %s415 = sand.u32 %s271, 1
        %s416 = smul.addr %s415, 8
        %s417 = scalar_lea.vmem [#allocation12], %s416
        %p418 = scmp.lt.s32.totalorder %s27, 1
        %s419 = scalar_select %p418, %s27, 1
        %s420 = smul.addr %s419, 8
        %s421 = scalar_lea.vmem %s0, %s420
        %v423 = vld [vmem:[%s421] sm:$0xff]
        %v424 = vpack.c.bf16 %v423, %v423
        %v425 = vld [vmem:[#allocation6] sm:$0xf]
        %v426 = vld [vmem:[#allocation6 + $0x4] sm:$0xf]
        %v427 = vld [vmem:[#allocation6 + $0x8] sm:$0xf]
        %v428 = vld [vmem:[#allocation6 + $0xc] sm:$0xf]
        %v433 = vunpack.c.l.b16 %v425
        %v434 = vunpack.c.l.b16 %v426
        %v435 = vunpack.c.l.b16 %v427
        %v436 = vunpack.c.l.b16 %v428
        %v437 = vpack.c.b16 %v434, %v433
        %v438 = vpack.c.b16 %v436, %v435
        %vm441 = vcmask 261120
        %v443 = vsel %vm441, %v424, 0
        %445 = vmatprep.subr.bf16.mxu0 0
        %446 = vmatpush1.bf16.msra.mxu0 0
        %447 = vmatprep.subr.bf16.mxu0 0
        %448 = vmatpush1.bf16.msra.mxu0 0
        %449 = vmatprep.subr.bf16.mxu0 0
        %450 = vmatpush1.bf16.msra.mxu0 0
        %451 = vmatprep.subr.bf16.mxu0 0
        %452 = vmatpush1.bf16.msra.mxu0 0
        %453 = vmatprep.subr.bf16.mxu0 0
        %454 = vmatpush1.bf16.msra.mxu0 0
        %455 = vmatprep.subr.bf16.mxu0 0
        %456 = vmatpush1.bf16.msra.mxu0 0
        %457 = vmatprep.subr.bf16.mxu0 0
        %458 = vmatpush1.bf16.msra.mxu0 %v438
        %459 = vmatprep.subr.bf16.mxu0 0
        %460 = vmatpush1.bf16.msra.mxu0 %v437
        %461 = vmatprep.subr.bf16.mxu0 0
        %462 = vmatpush2.bf16.msra.mxu0 0
        %463 = vmatprep.subr.bf16.mxu0 0
        %464 = vmatpush2.bf16.msra.mxu0 0
        %465 = vmatprep.subr.bf16.mxu0 0
        %466 = vmatpush2.bf16.msra.mxu0 0
        %467 = vmatprep.subr.bf16.mxu0 0
        %468 = vmatpush2.bf16.msra.mxu0 0
        %469 = vmatprep.subr.bf16.mxu0 0
        %470 = vmatpush2.bf16.msra.mxu0 0
        %471 = vmatprep.subr.bf16.mxu0 0
        %472 = vmatpush2.bf16.msra.mxu0 0
        %473 = vmatprep.subr.bf16.mxu0 0
        %474 = vmatpush2.bf16.msra.mxu0 0
        %475 = vmatprep.subr.bf16.mxu0 0
        %476 = vmatpush2.bf16.msra.mxu0 0
        %477 = vmatprep.mubr.bf16.mxu0 0
        %478 = vmatmul.mubr.bf16.gmra.mxu0 %v443
        %v479 = vpop.f32.mrf.mxu0
        %v480 = vadd.f32 0.0, %v479
        %v481 = vpop.f32.mrf.mxu0
        %v482 = vpop.f32.mrf.mxu0
        %v483 = vpop.f32.mrf.mxu0
        %484 = vdwg.mxu0
        %v486 = vrot.slane %v480, 5
        %vm488 = vcmask 1042432
        %v489 = vsel %vm488, 0.0, %v486
        %v490 = vld [vmem:[%s3] sm:$0x1]
        %v491 = vld [vmem:[#allocation9] sm:$0x1]
        %v492 = vlaneseq
        %v493 = vshrl.u32 %v492, 7
        %v494 = vsub.s32 0, %v493
        %v495 = vrot.slane %v491, %v494
        %v496 = vmul.f32 %v495, %v489
        %v498 = vlaneseq
        %v499 = vshrl.u32 %v498, 7
        %v500 = vsub.s32 0, %v499
        %v501 = vrot.slane %v490, %v500
        %v503 = vadd.f32 %v501, %v496
        %v504 = vld [vmem:[#allocation9 + $0x1] sm:$0x1]
        %v505 = vlaneseq
        %v506 = vshrl.u32 %v505, 7
        %v507 = vsub.s32 0, %v506
        %v508 = vrot.slane %v504, %v507
        %v509 = vmul.f32 %v508, %v489
        %v510 = vmul.f32 %v508, %v486
        %vm513 = vcmask 1046528
        %v514 = vrot.slane %v509, 1
        %v515 = vrot.slane %v510, 1
        %v516 = vsel %vm513, %v514, %v515
        %v518 = vadd.f32 %v503, %v516
        %v519 = vld [vmem:[#allocation9 + $0x2] sm:$0x1]
        %v520 = vlaneseq
        %v521 = vshrl.u32 %v520, 7
        %v522 = vsub.s32 0, %v521
        %v523 = vrot.slane %v519, %v522
        %v524 = vmul.f32 %v523, %v489
        %v525 = vmul.f32 %v523, %v486
        %vm528 = vcmask 1045504
        %v529 = vrot.slane %v524, 2
        %v530 = vrot.slane %v525, 2
        %v531 = vsel %vm528, %v529, %v530
        %v533 = vadd.f32 %v518, %v531
        %v534 = vld [vmem:[#allocation9 + $0x3] sm:$0x1]
        %v535 = vlaneseq
        %v536 = vshrl.u32 %v535, 7
        %v537 = vsub.s32 0, %v536
        %v538 = vrot.slane %v534, %v537
        %v539 = vmul.f32 %v538, %v489
        %v540 = vmul.f32 %v538, %v486
        %vm543 = vcmask 1044480
        %v544 = vrot.slane %v539, 3
        %v545 = vrot.slane %v540, 3
        %v546 = vsel %vm543, %v544, %v545
        %v548 = vadd.f32 %v533, %v546
        %v549 = vxor.u32 %v548, 2147483648
        %v550 = vmul.f32 %v549, 1.442695
        %v551 = vpow.pop %v550
        %v552 = vadd.f32 %v551, 1.0
        %v553 = vrcp.pop %v552
        %v554 = vmul.f32 1.0, %v553
        %v555 = vmul.f32 %v548, %v554
        %v556 = vpack.c.bf16 %v555, %v555
        %v557 = vld [vmem:[%s4] sm:$0xf]
        %v558 = vld [vmem:[%s4 + $0x4] sm:$0xf]
        %v559 = vld [vmem:[%s4 + $0x8] sm:$0xf]
        %v560 = vld [vmem:[%s4 + $0xc] sm:$0xf]
        %v561 = vld [vmem:[%s4 + $0x10] sm:$0xf]
        %v562 = vld [vmem:[%s4 + $0x14] sm:$0xf]
        %v563 = vld [vmem:[%s4 + $0x18] sm:$0xf]
        %v564 = vld [vmem:[%s4 + $0x1c] sm:$0xf]
        %v573 = vunpack.c.l.b16 %v557
        %v574 = vunpack.c.l.b16 %v558
        %v575 = vunpack.c.l.b16 %v559
        %v576 = vunpack.c.l.b16 %v560
        %v577 = vunpack.c.l.b16 %v561
        %v578 = vunpack.c.l.b16 %v562
        %v579 = vunpack.c.l.b16 %v563
        %v580 = vunpack.c.l.b16 %v564
        %v581 = vpack.c.b16 %v574, %v573
        %v582 = vpack.c.b16 %v576, %v575
        %v583 = vpack.c.b16 %v578, %v577
        %v584 = vpack.c.b16 %v580, %v579
        %vm589 = vcmask 523264
        %v591 = vsel %vm589, %v556, 0
        %593 = vmatprep.subr.bf16.mxu0 0
        %594 = vmatpush1.bf16.msra.mxu0 0
        %595 = vmatprep.subr.bf16.mxu0 0
        %596 = vmatpush1.bf16.msra.mxu0 0
        %597 = vmatprep.subr.bf16.mxu0 0
        %598 = vmatpush1.bf16.msra.mxu0 0
        %599 = vmatprep.subr.bf16.mxu0 0
        %600 = vmatpush1.bf16.msra.mxu0 0
        %601 = vmatprep.subr.bf16.mxu0 0
        %602 = vmatpush1.bf16.msra.mxu0 %v584
        %603 = vmatprep.subr.bf16.mxu0 0
        %604 = vmatpush1.bf16.msra.mxu0 %v583
        %605 = vmatprep.subr.bf16.mxu0 0
        %606 = vmatpush1.bf16.msra.mxu0 %v582
        %607 = vmatprep.subr.bf16.mxu0 0
        %608 = vmatpush1.bf16.msra.mxu0 %v581
        %609 = vmatprep.subr.bf16.mxu0 0
        %610 = vmatpush2.bf16.msra.mxu0 0
        %611 = vmatprep.subr.bf16.mxu0 0
        %612 = vmatpush2.bf16.msra.mxu0 0
        %613 = vmatprep.subr.bf16.mxu0 0
        %614 = vmatpush2.bf16.msra.mxu0 0
        %615 = vmatprep.subr.bf16.mxu0 0
        %616 = vmatpush2.bf16.msra.mxu0 0
        %617 = vmatprep.subr.bf16.mxu0 0
        %618 = vmatpush2.bf16.msra.mxu0 0
        %619 = vmatprep.subr.bf16.mxu0 0
        %620 = vmatpush2.bf16.msra.mxu0 0
        %621 = vmatprep.subr.bf16.mxu0 0
        %622 = vmatpush2.bf16.msra.mxu0 0
        %623 = vmatprep.subr.bf16.mxu0 0
        %624 = vmatpush2.bf16.msra.mxu0 0
        %625 = vmatprep.mubr.bf16.mxu0 0
        %626 = vmatmul.mubr.bf16.gmra.mxu0 %v591
        %v627 = vpop.f32.mrf.mxu0
        %v628 = vadd.f32 0.0, %v627
        %v629 = vpop.f32.mrf.mxu0
        %v630 = vpop.f32.mrf.mxu0
        %v631 = vpop.f32.mrf.mxu0
        %632 = vdwg.mxu0
        %v633 = vld [vmem:[#allocation11] sm:$0x1]
        %v635 = vlaneseq
        %v636 = vshrl.u32 %v635, 7
        %v637 = vsub.s32 0, %v636
        %v638 = vrot.slane %v633, %v637
        %v640 = vadd.f32 %v628, %v638
        %v641 = vmax.f32 %v640, 0.0
        %vm642 = vcmp.ne.f32.partialorder %v640, %v640
        %v643 = vadd.f32 %v640, 0.0
        %v644 = vand.u32 2147483647, %v640
        %v645 = vsub.f32 0.0, %v644
        %v646 = vmul.f32 %v645, 1.442695
        %v647 = vpow.pop %v646
        %v648 = vadd.f32 %v647, 1.0
        %v649 = vlog2.pop %v648
        %v650 = vmul.f32 %v649, 0.6931472
        %v651 = vmul.f32 -0.5, %v647
        %v652 = vadd.f32 %v651, 1.0
        %v653 = vmul.f32 %v652, %v647
        %v654 = vand.u32 2147483647, %v647
        %vm655 = vcmp.lt.f32.partialorder %v654, 0.0004427343
        %v656 = vsel %vm655, %v653, %v650
        %v657 = vadd.f32 %v641, %v656
        %v658 = vsel %vm642, %v643, %v657
        %v659 = vmul.f32 %v658, %v555
        %v660 = vld [vmem:[%s6] sm:$0xff]
        %v662 = vcombine.high %v658, %v658
        %v664 = vunpack.c.l.s4 1966171168
        %v665 = vunpack.c.0.s8 %v664
        %v666 = vlaneseq
        %v667 = vshrl.u32 %v666, 7
        %v668 = vsub.s32 %v665, %v667
        %v669 = vrot.slane %v658, %v668
        %v671 = vunpack.c.l.s4 1966171168
        %v672 = vunpack.c.0.s8 %v671
        %v673 = vlaneseq
        %v674 = vshrl.u32 %v673, 7
        %v675 = vsub.s32 %v672, %v674
        %v676 = vrot.slane %v662, %v675
        %v677 = vcombine.high %v669, %v669
        %v678 = vcombine.high %v676, %v676
        %v680 = vunpack.c.l.s4 1966171168
        %v681 = vunpack.c.0.s8 %v680
        %v682 = vlaneseq
        %v683 = vshrl.u32 %v682, 7
        %v684 = vsub.s32 %v681, %v683
        %v685 = vrot.slane %v669, %v684
        %v687 = vunpack.c.l.s4 1966171168
        %v688 = vunpack.c.0.s8 %v687
        %v689 = vlaneseq
        %v690 = vshrl.u32 %v689, 7
        %v691 = vsub.s32 %v688, %v690
        %v692 = vrot.slane %v676, %v691
        %v694 = vunpack.c.l.s4 1966171168
        %v695 = vunpack.c.0.s8 %v694
        %v696 = vlaneseq
        %v697 = vshrl.u32 %v696, 7
        %v698 = vsub.s32 %v695, %v697
        %v699 = vrot.slane %v677, %v698
        %v701 = vunpack.c.l.s4 1966171168
        %v702 = vunpack.c.0.s8 %v701
        %v703 = vlaneseq
        %v704 = vshrl.u32 %v703, 7
        %v705 = vsub.s32 %v702, %v704
        %v706 = vrot.slane %v678, %v705
        %v707 = vcombine.high %v685, %v685
        %v708 = vcombine.high %v692, %v692
        %v709 = vcombine.high %v699, %v699
        %v710 = vcombine.high %v706, %v706
        %v711 = vlaneseq
        %v712 = vshrl.u32 %v711, 7
        %v713 = vsub.s32 0, %v712
        %v714 = vrot.slane %v685, %v713
        %v715 = vlaneseq
        %v716 = vshrl.u32 %v715, 7
        %v717 = vsub.s32 0, %v716
        %v718 = vrot.slane %v699, %v717
        %v719 = vlaneseq
        %v720 = vshrl.u32 %v719, 7
        %v721 = vsub.s32 0, %v720
        %v722 = vrot.slane %v707, %v721
        %v723 = vlaneseq
        %v724 = vshrl.u32 %v723, 7
        %v725 = vsub.s32 0, %v724
        %v726 = vrot.slane %v709, %v725
        %v727 = vlaneseq
        %v728 = vshrl.u32 %v727, 7
        %v729 = vsub.s32 0, %v728
        %v730 = vrot.slane %v692, %v729
        %v731 = vlaneseq
        %v732 = vshrl.u32 %v731, 7
        %v733 = vsub.s32 0, %v732
        %v734 = vrot.slane %v706, %v733
        %v735 = vlaneseq
        %v736 = vshrl.u32 %v735, 7
        %v737 = vsub.s32 0, %v736
        %v738 = vrot.slane %v708, %v737
        %v739 = vlaneseq
        %v740 = vshrl.u32 %v739, 7
        %v741 = vsub.s32 0, %v740
        %v742 = vrot.slane %v710, %v741
        %v751 = vmul.f32 %v714, %v660
        %v752 = vmul.f32 %v718, %v660
        %v753 = vmul.f32 %v722, %v660
        %v754 = vmul.f32 %v726, %v660
        %v755 = vmul.f32 %v730, %v660
        %v756 = vmul.f32 %v734, %v660
        %v757 = vmul.f32 %v738, %v660
        %v758 = vmul.f32 %v742, %v660
        %v759 = vmul.f32 %v751, 1.442695
        %v760 = vpow.pop %v759
        %v761 = vmul.f32 %v752, 1.442695
        %v762 = vpow.pop %v761
        %v763 = vmul.f32 %v753, 1.442695
        %v764 = vpow.pop %v763
        %v765 = vmul.f32 %v754, 1.442695
        %v766 = vpow.pop %v765
        %v767 = vmul.f32 %v755, 1.442695
        %v768 = vpow.pop %v767
        %v769 = vmul.f32 %v756, 1.442695
        %v770 = vpow.pop %v769
        %v771 = vmul.f32 %v757, 1.442695
        %v772 = vpow.pop %v771
        %v773 = vmul.f32 %v758, 1.442695
        %v774 = vpow.pop %v773
        %775 = vst.msk [vmem:[#allocation2] sm:$0xff] %vm589, %v760
        %776 = vst.msk [vmem:[#allocation2 + $0x8] sm:$0xff] %vm589, %v762
        %777 = vst.msk [vmem:[#allocation2 + $0x10] sm:$0xff] %vm589, %v764
        %778 = vst.msk [vmem:[#allocation2 + $0x18] sm:$0xff] %vm589, %v766
        %779 = vst.msk [vmem:[#allocation2 + $0x20] sm:$0xff] %vm589, %v768
        %780 = vst.msk [vmem:[#allocation2 + $0x28] sm:$0xff] %vm589, %v770
        %781 = vst.msk [vmem:[#allocation2 + $0x30] sm:$0xff] %vm589, %v772
        %782 = vst.msk [vmem:[#allocation2 + $0x38] sm:$0xff] %vm589, %v774
        %v784 = vcombine.high %v659, %v659
        %v786 = vunpack.c.l.s4 1966171168
        %v787 = vunpack.c.0.s8 %v786
        %v788 = vlaneseq
        %v789 = vshrl.u32 %v788, 7
        %v790 = vsub.s32 %v787, %v789
        %v791 = vrot.slane %v659, %v790
        %v793 = vunpack.c.l.s4 1966171168
        %v794 = vunpack.c.0.s8 %v793
        %v795 = vlaneseq
        %v796 = vshrl.u32 %v795, 7
        %v797 = vsub.s32 %v794, %v796
        %v798 = vrot.slane %v784, %v797
        %v799 = vcombine.high %v791, %v791
        %v800 = vcombine.high %v798, %v798
        %v802 = vunpack.c.l.s4 1966171168
        %v803 = vunpack.c.0.s8 %v802
        %v804 = vlaneseq
        %v805 = vshrl.u32 %v804, 7
        %v806 = vsub.s32 %v803, %v805
        %v807 = vrot.slane %v791, %v806
        %v809 = vunpack.c.l.s4 1966171168
        %v810 = vunpack.c.0.s8 %v809
        %v811 = vlaneseq
        %v812 = vshrl.u32 %v811, 7
        %v813 = vsub.s32 %v810, %v812
        %v814 = vrot.slane %v798, %v813
        %v816 = vunpack.c.l.s4 1966171168
        %v817 = vunpack.c.0.s8 %v816
        %v818 = vlaneseq
        %v819 = vshrl.u32 %v818, 7
        %v820 = vsub.s32 %v817, %v819
        %v821 = vrot.slane %v799, %v820
        %v823 = vunpack.c.l.s4 1966171168
        %v824 = vunpack.c.0.s8 %v823
        %v825 = vlaneseq
        %v826 = vshrl.u32 %v825, 7
        %v827 = vsub.s32 %v824, %v826
        %v828 = vrot.slane %v800, %v827
        %v829 = vcombine.high %v807, %v807
        %v830 = vcombine.high %v814, %v814
        %v831 = vcombine.high %v821, %v821
        %v832 = vcombine.high %v828, %v828
        %v833 = vlaneseq
        %v834 = vshrl.u32 %v833, 7
        %v835 = vsub.s32 0, %v834
        %v836 = vrot.slane %v628, %v835
        %s838 = sor.u32 256, 64
        %839 = vbcast.lane.b32.xlu0 %v836, %s838
        %v840 = vpop.permute.xlu0 %839
        %v841 = vlaneseq
        %v842 = vshrl.u32 %v841, 7
        %v843 = vsub.s32 1, %v842
        %v844 = vrot.slane %v628, %v843
        %s846 = sor.u32 256, 64
        %847 = vbcast.lane.b32.xlu0 %v844, %s846
        %v848 = vpop.permute.xlu0 %847
        %v849 = vlaneseq
        %v850 = vshrl.u32 %v849, 7
        %v851 = vsub.s32 2, %v850
        %v852 = vrot.slane %v628, %v851
        %s854 = sor.u32 256, 64
        %855 = vbcast.lane.b32.xlu0 %v852, %s854
        %v856 = vpop.permute.xlu0 %855
        %v857 = vlaneseq
        %v858 = vshrl.u32 %v857, 7
        %v859 = vsub.s32 3, %v858
        %v860 = vrot.slane %v628, %v859
        %s862 = sor.u32 256, 64
        %863 = vbcast.lane.b32.xlu0 %v860, %s862
        %v864 = vpop.permute.xlu0 %863
        %v865 = vlaneseq
        %v866 = vshrl.u32 %v865, 7
        %v867 = vsub.s32 4, %v866
        %v868 = vrot.slane %v628, %v867
        %s870 = sor.u32 256, 64
        %871 = vbcast.lane.b32.xlu0 %v868, %s870
        %v872 = vpop.permute.xlu0 %871
        %v873 = vlaneseq
        %v874 = vshrl.u32 %v873, 7
        %v875 = vsub.s32 5, %v874
        %v876 = vrot.slane %v628, %v875
        %s878 = sor.u32 256, 64
        %879 = vbcast.lane.b32.xlu0 %v876, %s878
        %v880 = vpop.permute.xlu0 %879
        %v881 = vlaneseq
        %v882 = vshrl.u32 %v881, 7
        %v883 = vsub.s32 6, %v882
        %v884 = vrot.slane %v628, %v883
        %s886 = sor.u32 256, 64
        %887 = vbcast.lane.b32.xlu0 %v884, %s886
        %v888 = vpop.permute.xlu0 %887
        %v889 = vlaneseq
        %v890 = vshrl.u32 %v889, 7
        %v891 = vsub.s32 7, %v890
        %v892 = vrot.slane %v628, %v891
        %s894 = sor.u32 256, 64
        %895 = vbcast.lane.b32.xlu0 %v892, %s894
        %v896 = vpop.permute.xlu0 %895
        %v897 = vlaneseq
        %v898 = vshrl.u32 %v897, 7
        %v899 = vsub.s32 0, %v898
        %v900 = vrot.slane %v807, %v899
        %v901 = vlaneseq
        %v902 = vshrl.u32 %v901, 7
        %v903 = vsub.s32 0, %v902
        %v904 = vrot.slane %v821, %v903
        %v905 = vlaneseq
        %v906 = vshrl.u32 %v905, 7
        %v907 = vsub.s32 0, %v906
        %v908 = vrot.slane %v829, %v907
        %v909 = vlaneseq
        %v910 = vshrl.u32 %v909, 7
        %v911 = vsub.s32 0, %v910
        %v912 = vrot.slane %v831, %v911
        %v913 = vlaneseq
        %v914 = vshrl.u32 %v913, 7
        %v915 = vsub.s32 0, %v914
        %v916 = vrot.slane %v814, %v915
        %v917 = vlaneseq
        %v918 = vshrl.u32 %v917, 7
        %v919 = vsub.s32 0, %v918
        %v920 = vrot.slane %v828, %v919
        %v921 = vlaneseq
        %v922 = vshrl.u32 %v921, 7
        %v923 = vsub.s32 0, %v922
        %v924 = vrot.slane %v830, %v923
        %v925 = vlaneseq
        %v926 = vshrl.u32 %v925, 7
        %v927 = vsub.s32 0, %v926
        %v928 = vrot.slane %v832, %v927
        %v937 = vmul.f32 %v900, %v840
        %v938 = vmul.f32 %v904, %v848
        %v939 = vmul.f32 %v908, %v856
        %v940 = vmul.f32 %v912, %v864
        %v941 = vmul.f32 %v916, %v872
        %v942 = vmul.f32 %v920, %v880
        %v943 = vmul.f32 %v924, %v888
        %v944 = vmul.f32 %v928, %v896
        %945 = vst.msk [vmem:[#allocation3] sm:$0xff] %vm589, %v937
        %946 = vst.msk [vmem:[#allocation3 + $0x8] sm:$0xff] %vm589, %v938
        %947 = vst.msk [vmem:[#allocation3 + $0x10] sm:$0xff] %vm589, %v939
        %948 = vst.msk [vmem:[#allocation3 + $0x18] sm:$0xff] %vm589, %v940
        %949 = vst.msk [vmem:[#allocation3 + $0x20] sm:$0xff] %vm589, %v941
        %950 = vst.msk [vmem:[#allocation3 + $0x28] sm:$0xff] %vm589, %v942
        %951 = vst.msk [vmem:[#allocation3 + $0x30] sm:$0xff] %vm589, %v943
        %952 = vst.msk [vmem:[#allocation3 + $0x38] sm:$0xff] %vm589, %v944
        %v953 = vld [vmem:[#allocation2] sm:$0xff]
        %v954 = vmul.f32 %v953, 0.0
        %v955 = vld [vmem:[#allocation3] sm:$0xff]
        %v956 = vadd.f32 %v954, %v955
        %957 = vst.msk [vmem:[#allocation4] sm:$0xff] %vm589, %v956
        %s958 = scalar_lea.vmem [#allocation2], 8
        %v959 = vld [vmem:[%s958] sm:$0xff]
        %v960 = vmul.f32 %v959, %v956
        %s961 = scalar_lea.vmem [#allocation3], 8
        %v962 = vld [vmem:[%s961] sm:$0xff]
        %v963 = vadd.f32 %v960, %v962
        %s964 = scalar_lea.vmem [#allocation4], 8
        %965 = vst.msk [vmem:[%s964] sm:$0xff] %vm589, %v963
        %s966 = scalar_lea.vmem [#allocation2], 16
        %v967 = vld [vmem:[%s966] sm:$0xff]
        %v968 = vmul.f32 %v967, %v963
        %s969 = scalar_lea.vmem [#allocation3], 16
        %v970 = vld [vmem:[%s969] sm:$0xff]
        %v971 = vadd.f32 %v968, %v970
        %s972 = scalar_lea.vmem [#allocation4], 16
        %973 = vst.msk [vmem:[%s972] sm:$0xff] %vm589, %v971
        %s974 = scalar_lea.vmem [#allocation2], 24
        %v975 = vld [vmem:[%s974] sm:$0xff]
        %v976 = vmul.f32 %v975, %v971
        %s977 = scalar_lea.vmem [#allocation3], 24
        %v978 = vld [vmem:[%s977] sm:$0xff]
        %v979 = vadd.f32 %v976, %v978
        %s980 = scalar_lea.vmem [#allocation4], 24
        %981 = vst.msk [vmem:[%s980] sm:$0xff] %vm589, %v979
        %s982 = scalar_lea.vmem [#allocation2], 32
        %v983 = vld [vmem:[%s982] sm:$0xff]
        %v984 = vmul.f32 %v983, %v979
        %s985 = scalar_lea.vmem [#allocation3], 32
        %v986 = vld [vmem:[%s985] sm:$0xff]
        %v987 = vadd.f32 %v984, %v986
        %s988 = scalar_lea.vmem [#allocation4], 32
        %989 = vst.msk [vmem:[%s988] sm:$0xff] %vm589, %v987
        %s990 = scalar_lea.vmem [#allocation2], 40
        %v991 = vld [vmem:[%s990] sm:$0xff]
        %v992 = vmul.f32 %v991, %v987
        %s993 = scalar_lea.vmem [#allocation3], 40
        %v994 = vld [vmem:[%s993] sm:$0xff]
        %v995 = vadd.f32 %v992, %v994
        %s996 = scalar_lea.vmem [#allocation4], 40
        %997 = vst.msk [vmem:[%s996] sm:$0xff] %vm589, %v995
        %s998 = scalar_lea.vmem [#allocation2], 48
        %v999 = vld [vmem:[%s998] sm:$0xff]
        %v1000 = vmul.f32 %v999, %v995
        %s1001 = scalar_lea.vmem [#allocation3], 48
        %v1002 = vld [vmem:[%s1001] sm:$0xff]
        %v1003 = vadd.f32 %v1000, %v1002
        %s1004 = scalar_lea.vmem [#allocation4], 48
        %1005 = vst.msk [vmem:[%s1004] sm:$0xff] %vm589, %v1003
        %s1006 = scalar_lea.vmem [#allocation2], 56
        %v1007 = vld [vmem:[%s1006] sm:$0xff]
        %v1008 = vmul.f32 %v1007, %v1003
        %s1009 = scalar_lea.vmem [#allocation3], 56
        %v1010 = vld [vmem:[%s1009] sm:$0xff]
        %v1011 = vadd.f32 %v1008, %v1010
        %s1012 = scalar_lea.vmem [#allocation4], 56
        %1013 = vst.msk [vmem:[%s1012] sm:$0xff] %vm589, %v1011
        %s1015 = sor.u32 256, 72
        %1016 = vbcast.lane.b32.xlu0 %v836, %s1015
        %v1017 = vpop.permute.xlu0 %1016
        %s1019 = sor.u32 256, 72
        %1020 = vbcast.lane.b32.xlu0 %v844, %s1019
        %v1021 = vpop.permute.xlu0 %1020
        %s1023 = sor.u32 256, 72
        %1024 = vbcast.lane.b32.xlu0 %v852, %s1023
        %v1025 = vpop.permute.xlu0 %1024
        %s1027 = sor.u32 256, 72
        %1028 = vbcast.lane.b32.xlu0 %v860, %s1027
        %v1029 = vpop.permute.xlu0 %1028
        %s1031 = sor.u32 256, 72
        %1032 = vbcast.lane.b32.xlu0 %v868, %s1031
        %v1033 = vpop.permute.xlu0 %1032
        %s1035 = sor.u32 256, 72
        %1036 = vbcast.lane.b32.xlu0 %v876, %s1035
        %v1037 = vpop.permute.xlu0 %1036
        %s1039 = sor.u32 256, 72
        %1040 = vbcast.lane.b32.xlu0 %v884, %s1039
        %v1041 = vpop.permute.xlu0 %1040
        %s1043 = sor.u32 256, 72
        %1044 = vbcast.lane.b32.xlu0 %v892, %s1043
        %v1045 = vpop.permute.xlu0 %1044
        %v1046 = vld [vmem:[#allocation4] sm:$0xff]
        %v1047 = vld [vmem:[#allocation4 + $0x8] sm:$0xff]
        %v1048 = vld [vmem:[#allocation4 + $0x10] sm:$0xff]
        %v1049 = vld [vmem:[#allocation4 + $0x18] sm:$0xff]
        %v1050 = vld [vmem:[#allocation4 + $0x20] sm:$0xff]
        %v1051 = vld [vmem:[#allocation4 + $0x28] sm:$0xff]
        %v1052 = vld [vmem:[#allocation4 + $0x30] sm:$0xff]
        %v1053 = vld [vmem:[#allocation4 + $0x38] sm:$0xff]
        %v1054 = vmul.f32 %v1017, %v1046
        %v1055 = vmul.f32 %v1021, %v1047
        %v1056 = vmul.f32 %v1025, %v1048
        %v1057 = vmul.f32 %v1029, %v1049
        %v1058 = vmul.f32 %v1033, %v1050
        %v1059 = vmul.f32 %v1037, %v1051
        %v1060 = vmul.f32 %v1041, %v1052
        %v1061 = vmul.f32 %v1045, %v1053
        %v1062 = vsel %vm589, %v1054, 0.0
        %v1063 = vrot.slane %v1062, 4
        %v1064 = vadd.f32 %v1062, %v1063
        %v1065 = vrot.slane %v1064, 2
        %v1066 = vadd.f32 %v1064, %v1065
        %v1067 = vrot.slane %v1066, 1
        %v1068 = vadd.f32 %v1066, %v1067
        %v1069 = vsel %vm589, %v1055, 0.0
        %v1070 = vrot.slane %v1069, 4
        %v1071 = vadd.f32 %v1069, %v1070
        %v1072 = vrot.slane %v1071, 2
        %v1073 = vadd.f32 %v1071, %v1072
        %v1074 = vrot.slane %v1073, 1
        %v1075 = vadd.f32 %v1073, %v1074
        %v1076 = vsel %vm589, %v1056, 0.0
        %v1077 = vrot.slane %v1076, 4
        %v1078 = vadd.f32 %v1076, %v1077
        %v1079 = vrot.slane %v1078, 2
        %v1080 = vadd.f32 %v1078, %v1079
        %v1081 = vrot.slane %v1080, 1
        %v1082 = vadd.f32 %v1080, %v1081
        %v1083 = vsel %vm589, %v1057, 0.0
        %v1084 = vrot.slane %v1083, 4
        %v1085 = vadd.f32 %v1083, %v1084
        %v1086 = vrot.slane %v1085, 2
        %v1087 = vadd.f32 %v1085, %v1086
        %v1088 = vrot.slane %v1087, 1
        %v1089 = vadd.f32 %v1087, %v1088
        %v1090 = vsel %vm589, %v1058, 0.0
        %v1091 = vrot.slane %v1090, 4
        %v1092 = vadd.f32 %v1090, %v1091
        %v1093 = vrot.slane %v1092, 2
        %v1094 = vadd.f32 %v1092, %v1093
        %v1095 = vrot.slane %v1094, 1
        %v1096 = vadd.f32 %v1094, %v1095
        %v1097 = vsel %vm589, %v1059, 0.0
        %v1098 = vrot.slane %v1097, 4
        %v1099 = vadd.f32 %v1097, %v1098
        %v1100 = vrot.slane %v1099, 2
        %v1101 = vadd.f32 %v1099, %v1100
        %v1102 = vrot.slane %v1101, 1
        %v1103 = vadd.f32 %v1101, %v1102
        %v1104 = vsel %vm589, %v1060, 0.0
        %v1105 = vrot.slane %v1104, 4
        %v1106 = vadd.f32 %v1104, %v1105
        %v1107 = vrot.slane %v1106, 2
        %v1108 = vadd.f32 %v1106, %v1107
        %v1109 = vrot.slane %v1108, 1
        %v1110 = vadd.f32 %v1108, %v1109
        %v1111 = vsel %vm589, %v1061, 0.0
        %v1112 = vrot.slane %v1111, 4
        %v1113 = vadd.f32 %v1111, %v1112
        %v1114 = vrot.slane %v1113, 2
        %v1115 = vadd.f32 %v1113, %v1114
        %v1116 = vrot.slane %v1115, 1
        %v1117 = vadd.f32 %v1115, %v1116
        %vm1126 = vcmask 1041409
        %v1127 = vsel %vm1126, %v1075, %v1068
        %vm1128 = vcmask 1042434
        %v1129 = vsel %vm1128, %v1082, %v1127
        %vm1130 = vcmask 1043459
        %v1131 = vsel %vm1130, %v1089, %v1129
        %vm1132 = vcmask 1044484
        %v1133 = vsel %vm1132, %v1096, %v1131
        %vm1134 = vcmask 1045509
        %v1135 = vsel %vm1134, %v1103, %v1133
        %vm1136 = vcmask 1046534
        %v1137 = vsel %vm1136, %v1110, %v1135
        %vm1138 = vcmask 1047559
        %v1139 = vsel %vm1138, %v1117, %v1137
        %1141 = vst.msk [vmem:[#allocation5] sm:$0xff] %vm589, %v1139
        %v1142 = vld [vmem:[#allocation5] sm:$0xff]
        %v1143 = vld [vmem:[%s7] sm:$0x1]
        %v1145 = vlaneseq
        %v1146 = vshrl.u32 %v1145, 7
        %v1147 = vsub.s32 0, %v1146
        %v1148 = vrot.slane %v1143, %v1147
        %v1150 = vmul.f32 %v1148, %v555
        %v1151 = vadd.f32 %v1142, %v1150
        %v1152 = vxor.u32 %v480, 2147483648
        %v1153 = vmul.f32 %v1152, 1.442695
        %v1154 = vpow.pop %v1153
        %v1155 = vadd.f32 %v1154, 1.0
        %v1156 = vrcp.pop %v1155
        %v1157 = vmul.f32 1.0, %v1156
        %v1158 = vmul.f32 %v480, %v1157
        %1160 = vrot.lane.b32.xlu0 %v1158, 64
        %v1161 = vpop.permute.xlu0 %1160
        %v1163 = vmul.f32 %v1151, %v1161
        %v1164 = vpack.c.bf16 %v1163, %v1163
        %v1165 = vld [vmem:[%s8] sm:$0xf]
        %v1166 = vld [vmem:[%s8 + $0x4] sm:$0xf]
        %v1167 = vld [vmem:[%s8 + $0x8] sm:$0xf]
        %v1168 = vld [vmem:[%s8 + $0xc] sm:$0xf]
        %v1169 = vld [vmem:[%s8 + $0x10] sm:$0xf]
        %v1170 = vld [vmem:[%s8 + $0x14] sm:$0xf]
        %v1171 = vld [vmem:[%s8 + $0x18] sm:$0xf]
        %v1172 = vld [vmem:[%s8 + $0x1c] sm:$0xf]
        %v1181 = vunpack.c.l.b16 %v1165
        %v1182 = vunpack.c.l.b16 %v1166
        %v1183 = vunpack.c.l.b16 %v1167
        %v1184 = vunpack.c.l.b16 %v1168
        %v1185 = vunpack.c.l.b16 %v1169
        %v1186 = vunpack.c.l.b16 %v1170
        %v1187 = vunpack.c.l.b16 %v1171
        %v1188 = vunpack.c.l.b16 %v1172
        %v1189 = vpack.c.b16 %v1182, %v1181
        %v1190 = vpack.c.b16 %v1184, %v1183
        %v1191 = vpack.c.b16 %v1186, %v1185
        %v1192 = vpack.c.b16 %v1188, %v1187
        %v1198 = vsel %vm589, %v1164, 0
        %1200 = vmatprep.subr.bf16.mxu0 0
        %1201 = vmatpush1.bf16.msra.mxu0 0
        %1202 = vmatprep.subr.bf16.mxu0 0
        %1203 = vmatpush1.bf16.msra.mxu0 0
        %1204 = vmatprep.subr.bf16.mxu0 0
        %1205 = vmatpush1.bf16.msra.mxu0 0
        %1206 = vmatprep.subr.bf16.mxu0 0
        %1207 = vmatpush1.bf16.msra.mxu0 0
        %1208 = vmatprep.subr.bf16.mxu0 0
        %1209 = vmatpush1.bf16.msra.mxu0 %v1192
        %1210 = vmatprep.subr.bf16.mxu0 0
        %1211 = vmatpush1.bf16.msra.mxu0 %v1191
        %1212 = vmatprep.subr.bf16.mxu0 0
        %1213 = vmatpush1.bf16.msra.mxu0 %v1190
        %1214 = vmatprep.subr.bf16.mxu0 0
        %1215 = vmatpush1.bf16.msra.mxu0 %v1189
        %1216 = vmatprep.subr.bf16.mxu0 0
        %1217 = vmatpush2.bf16.msra.mxu0 0
        %1218 = vmatprep.subr.bf16.mxu0 0
        %1219 = vmatpush2.bf16.msra.mxu0 0
        %1220 = vmatprep.subr.bf16.mxu0 0
        %1221 = vmatpush2.bf16.msra.mxu0 0
        %1222 = vmatprep.subr.bf16.mxu0 0
        %1223 = vmatpush2.bf16.msra.mxu0 0
        %1224 = vmatprep.subr.bf16.mxu0 0
        %1225 = vmatpush2.bf16.msra.mxu0 0
        %1226 = vmatprep.subr.bf16.mxu0 0
        %1227 = vmatpush2.bf16.msra.mxu0 0
        %1228 = vmatprep.subr.bf16.mxu0 0
        %1229 = vmatpush2.bf16.msra.mxu0 0
        %1230 = vmatprep.subr.bf16.mxu0 0
        %1231 = vmatpush2.bf16.msra.mxu0 0
        %1232 = vmatprep.mubr.bf16.mxu0 0
        %1233 = vmatmul.mubr.bf16.gmra.mxu0 %v1198
        %v1234 = vpop.f32.mrf.mxu0
        %v1235 = vadd.f32 0.0, %v1234
        %v1236 = vpop.f32.mrf.mxu0
        %v1237 = vpop.f32.mrf.mxu0
        %v1238 = vpop.f32.mrf.mxu0
        %1239 = vdwg.mxu0
        %v1240 = vadd.f32 %v423, %v1235
        %v1241 = vsel %vm441, %v1240, 0.0
        %1242 = vadd.xlane.f32.xlu0 %v1241
        %v1243 = vpop.xlane.xlu0 %1242
        %v1244 = vrcp.pop 32.0
        %v1245 = vmul.f32 %v1243, %v1244
        %v1246 = vsub.f32 %v1240, %v1245
        %v1247 = vmul.f32 %v1246, %v1246
        %v1248 = vsel %vm441, %v1247, 0.0
        %1249 = vadd.xlane.f32.xlu0 %v1248
        %v1250 = vpop.xlane.xlu0 %1249
        %v1251 = vmul.f32 %v1250, %v1244
        %v1252 = vadd.f32 %v1251, 1e-05
        %v1253 = vrsqrt.pop %v1252
        %v1254 = vmul.f32 %v1246, %v1253
        %v1255 = vld [vmem:[%s9] sm:$0x1]
        %v1257 = vlaneseq
        %v1258 = vshrl.u32 %v1257, 7
        %v1259 = vsub.s32 0, %v1258
        %v1260 = vrot.slane %v1255, %v1259
        %v1262 = vmul.f32 %v1254, %v1260
        %v1263 = vld [vmem:[%s10] sm:$0x1]
        %v1265 = vlaneseq
        %v1266 = vshrl.u32 %v1265, 7
        %v1267 = vsub.s32 0, %v1266
        %v1268 = vrot.slane %v1263, %v1267
        %v1270 = vadd.f32 %v1262, %v1268
        %1271 = vst.msk [vmem:[%s417] sm:$0xff] %vm441, %v1270
        %s1272 = sand.u32 %s271, 1
        %s1273 = scalar_lea.sflag [#allocation8], %s1272
        %s1274 = sand.u32 %s271, 1
        %s1275 = smul.addr %s1274, 8
        %s1276 = scalar_lea.vmem [#allocation12], %s1275
        // Predicated region
        $region77: #{tpu_custom_call.1} parent=63 // pred_check
          %p1277 = pneg %p281
        $region78: #{tpu_custom_call.1} parent=63 // pred_check_branch
          %1279 = sbr.rel (%p1277) target = $region80
        $region79: #{tpu_custom_call.1} parent=63 // pred_region
          %s1281 = ssub.s32 128, 128
          %1282 = vsyncadd %s1273, %s1281
          %s1283 = smul.addr %s27, 128
          %s1284 = scalar_lea.hbm %s11, %s1283
          %s1286 = sshll.u32 %s1276, 4
          %s1287 = int_to_ptr.vmem [resolvable:$true] %s1286
          %1289 = dma.vmem_to_hbm [thread:$0]  %s1287, 128, %s1284, %s1273
        $region80: #{tpu_custom_call.1} parent=63 // pred_fallthru
          _
      $region64: #{tpu_custom_call.1} parent=5 // pred_fallthru
        _
      %p1290 = scmp.le.s32.totalorder 2, %s22
      // Predicated region
      $region81: #{tpu_custom_call.1} parent=5 // pred_check
        %p1291 = pneg %p1290
      $region82: #{tpu_custom_call.1} parent=5 // pred_check_branch
        %1293 = sbr.rel (%p1291) target = $region84
      $region83: #{tpu_custom_call.1} parent=5 // pred_region
        %s1294 = ssub.s32 %s22, 2
        // Predicated region
        $region85: #{tpu_custom_call.1} parent=83 // pred_check
          %p1295 = pneg %p287
        $region86: #{tpu_custom_call.1} parent=83 // pred_check_branch
          %1297 = sbr.rel (%p1295) target = $region88
        $region87: #{tpu_custom_call.1} parent=83 // pred_region
          %s1298 = sand.u32 %s272, 1
          %s1299 = scalar_lea.sflag [#allocation8], %s1298
          %s1300 = sand.u32 %s272, 1
          %s1301 = smul.addr %s1300, 8
          %s1302 = scalar_lea.vmem [#allocation12], %s1301
          %1303 = dma.done %s1299, 128
        $region88: #{tpu_custom_call.1} parent=83 // pred_fallthru
          _
      $region84: #{tpu_custom_call.1} parent=5 // pred_fallthru
        _
    $region6: #{tpu_custom_call.1} parent=1 // loop_footer
      %s26 = sadd.s32 1, %s22
    $region7: #{tpu_custom_call.1} parent=1 // loop_footer_branch
      %21 = sbr.rel target = $region3
    $region8: #{tpu_custom_call.1} parent=1 // loop_exit
      _
    %1304 = vsyncpa [#allocation7], 1
    %s1305 = scalar_lea.sflag [#allocation7], 1
    %1306 = vsyncpa %s1305, 1
    %1307 = vsyncpa [#allocation10], 1
    %1308 = vsyncpa [#allocation8], 1
    %s1309 = scalar_lea.sflag [#allocation8], 1
    %1310 = vsyncpa %s1309, 1

</llo_original>
